<compile_context>
chip_gen: v6e
topology: v6e:2x2x1
jax: 0.10.0
libtpu: 0.0.40
codegen_flags: <defaults>
</compile_context>

<pallas_src>
from functools import partial

import jax
import jax.numpy as jnp
from jax.experimental import pallas as pl
from jax.experimental.pallas import tpu as pltpu


def _gconvnet_kernel(
    # per-graph (VMEM) inputs
    obj_ref, pred_ref, s_oh_ref, o_oh_ref, s_oh_t_ref, o_oh_t_ref, inv_cnt_ref,
    # shared stacked weights/biases (VMEM)
    w1s_ref, w1p_ref, w1o_ref, b1_ref,
    w2s_ref, w2p_ref, w2o_ref, b2s_ref, b2p_ref, b2o_ref,
    w3_ref, b3_ref, w4_ref, b4_ref,
    # outputs
    new_obj_ref, new_pred_ref,
    *, num_layers):
    f32 = jnp.float32
    bf16 = jnp.bfloat16

    obj_out = obj_ref[0]                    # (N, Dobj) f32 (only used if num_layers == 0)
    obj_bf = obj_out.astype(bf16)           # bf16 obj state carried across layers
    pred = pred_ref[0]                      # (T, Dpred) f32
    s_oh = s_oh_ref[0]                      # (T, N) bf16 — exact 0/1, gather side
    o_oh = o_oh_ref[0]                      # (T, N) bf16
    s_oh_t = s_oh_t_ref[0]                  # (N, T) bf16 — pre-transposed, scatter side
    o_oh_t = o_oh_t_ref[0]                  # (N, T) bf16
    inv_cnt = inv_cnt_ref[0]                # (N, 1) f32, precomputed 1/clamp(count,1)

    for l in range(num_layers):             # static unrolled fused layer loop
        # ---- net1 layer 0 (reassociated): project per-object, then one-hot gather ----
        proj_s = jnp.dot(obj_bf, w1s_ref[l], preferred_element_type=f32)   # (N, H)
        proj_o = jnp.dot(obj_bf, w1o_ref[l], preferred_element_type=f32)   # (N, H)
        h1 = (jnp.dot(s_oh, proj_s.astype(bf16), preferred_element_type=f32)
              + jnp.dot(pred.astype(bf16), w1p_ref[l], preferred_element_type=f32)
              + jnp.dot(o_oh, proj_o.astype(bf16), preferred_element_type=f32)
              + b1_ref[l])
        h1_bf = jnp.maximum(h1, 0.0).astype(bf16)                          # (T, H)

        # ---- net1 layer 1: Linear(H -> 2H+Dpred), w2 split by output block ----
        new_s = jnp.maximum(jnp.dot(h1_bf, w2s_ref[l], preferred_element_type=f32)
                            + b2s_ref[l], 0.0)                             # (T, H)
        new_p = jnp.maximum(jnp.dot(h1_bf, w2p_ref[l], preferred_element_type=f32)
                            + b2p_ref[l], 0.0)                             # (T, Dpred)
        new_o = jnp.maximum(jnp.dot(h1_bf, w2o_ref[l], preferred_element_type=f32)
                            + b2o_ref[l], 0.0)                             # (T, H)

        # ---- scatter-add pooling: plain last-dim contraction over T (lane-dense) ----
        pooled = (jnp.dot(s_oh_t, new_s.astype(bf16), preferred_element_type=f32)
                  + jnp.dot(o_oh_t, new_o.astype(bf16), preferred_element_type=f32))
        pooled = pooled * inv_cnt            # 'avg' pooling, counts hoisted to wrapper

        # ---- net2: Linear(H -> H) -> ReLU -> Linear(H -> Dout) -> ReLU ----
        h2 = jnp.maximum(jnp.dot(pooled.astype(bf16), w3_ref[l],
                                 preferred_element_type=f32) + b3_ref[l], 0.0)
        out_obj = jnp.maximum(jnp.dot(h2.astype(bf16), w4_ref[l],
                                      preferred_element_type=f32) + b4_ref[l], 0.0)

        obj_out = out_obj                    # f32 result of this layer
        obj_bf = out_obj.astype(bf16)        # feeds the next layer's projections
        pred = new_p

    new_obj_ref[0] = obj_out
    new_pred_ref[0] = pred


def graph_triple_conv_net_batched(obj_vecs, pred_vecs, edges, params):
    """Batched forward over B independent scene graphs in one pallas_call.

    obj_vecs: (B, N, Dobj)  pred_vecs: (B, T, Dpred)  edges: (B, T, 2) int
    """
    B, N, Dobj = obj_vecs.shape
    _, T, Dpred = pred_vecs.shape
    L = params["w1_s"].shape[0]
    Dout = params["w4"].shape[-1]
    assert Dout == Dobj, "output_dim=None => Dout == Dobj (required by the fused layer loop)"

    s_idx = edges[..., 0].astype(jnp.int32)                    # (B, T)
    o_idx = edges[..., 1].astype(jnp.int32)

    # Gather one-hots (T, N) and pre-transposed scatter one-hots (N, T); bf16 is
    # exact on 0/1 so the MXU gather/scatter is exact up to operand rounding of
    # the gathered values (which are cast to bf16 anyway).
    s_oh = jax.nn.one_hot(s_idx, N, dtype=jnp.bfloat16)        # (B, T, N)
    o_oh = jax.nn.one_hot(o_idx, N, dtype=jnp.bfloat16)        # (B, T, N)
    s_oh_t = jnp.swapaxes(s_oh, 1, 2)                          # (B, N, T)
    o_oh_t = jnp.swapaxes(o_oh, 1, 2)                          # (B, N, T)

    # 'avg' pooling counts depend only on edges -> hoist reciprocal out of the kernel.
    counts = jnp.sum(s_oh_t.astype(jnp.float32) + o_oh_t.astype(jnp.float32), axis=-1)
    inv_cnt = (1.0 / jnp.maximum(counts, 1.0))[..., None]      # (B, N, 1)

    def per_graph(*tail):
        nd = len(tail)
        return pl.BlockSpec((1,) + tuple(tail), lambda b, _n=nd: (b,) + (0,) * _n)

    def shared(arr):
        nd = arr.ndim
        return pl.BlockSpec(arr.shape, lambda b, _n=nd: (0,) * _n)

    graph_inputs = (obj_vecs, pred_vecs, s_oh, o_oh, s_oh_t, o_oh_t, inv_cnt)
    graph_specs = [per_graph(N, Dobj), per_graph(T, Dpred),
                   per_graph(T, N), per_graph(T, N),
                   per_graph(N, T), per_graph(N, T),
                   per_graph(N, 1)]

    param_keys = ("w1_s", "w1_p", "w1_o", "b1",
                  "w2_s", "w2_p", "w2_o", "b2_s", "b2_p", "b2_o",
                  "w3", "b3", "w4", "b4")
    param_inputs = tuple(params[k] for k in param_keys)
    param_specs = [shared(params[k]) for k in param_keys]

    return pl.pallas_call(
        partial(_gconvnet_kernel, num_layers=L),
        grid=(B,),
        out_shape=(jax.ShapeDtypeStruct((B, N, Dout), jnp.float32),
                   jax.ShapeDtypeStruct((B, T, Dpred), jnp.float32)),
        in_specs=graph_specs + param_specs,
        out_specs=(per_graph(N, Dout), per_graph(T, Dpred)),
        compiler_params=pltpu.CompilerParams(dimension_semantics=("parallel",)),
    )(*graph_inputs, *param_inputs)


def graph_triple_conv_net(obj_vecs, pred_vecs, edges, params):
    """Forward of GraphTripleConvNet (residual=False, pooling='avg', output_dim=None)."""
    new_obj, new_pred = graph_triple_conv_net_batched(
        obj_vecs[None], pred_vecs[None], edges[None], params)
    return new_obj[0], new_pred[0]


def init_layer_params(key, Dobj, Dpred, H, Dout):
    """One GraphTripleConv layer. Kaiming-normal weights (std from the FULL fan-in of
    each torch Linear), PyTorch-default uniform biases. w1 split by input block,
    w2 split by output block (equivalent to the unsplit Linear)."""
    ks = jax.random.split(key, 14)
    fan1 = 2 * Dobj + Dpred
    std1, bnd1 = (2.0 / fan1) ** 0.5, fan1 ** -0.5
    stdH, bndH = (2.0 / H) ** 0.5, H ** -0.5

    def normal(k, shape, std):
        return jax.random.normal(k, shape, jnp.float32) * std

    def uniform(k, shape, bnd):
        return jax.random.uniform(k, shape, jnp.float32, -bnd, bnd)

    return dict(
        # net1 layer 0: Linear(2*Dobj + Dpred -> H)
        w1_s=normal(ks[0], (Dobj, H), std1),
        w1_p=normal(ks[1], (Dpred, H), std1),
        w1_o=normal(ks[2], (Dobj, H), std1),
        b1=uniform(ks[3], (1, H), bnd1),
        # net1 layer 1: Linear(H -> 2*H + Dpred)
        w2_s=normal(ks[4], (H, H), stdH),
        w2_p=normal(ks[5], (H, Dpred), stdH),
        w2_o=normal(ks[6], (H, H), stdH),
        b2_s=uniform(ks[7], (1, H), bndH),
        b2_p=uniform(ks[8], (1, Dpred), bndH),
        b2_o=uniform(ks[9], (1, H), bndH),
        # net2: Linear(H -> H) -> ReLU -> Linear(H -> Dout) -> ReLU
        w3=normal(ks[10], (H, H), stdH),
        b3=uniform(ks[11], (1, H), bndH),
        w4=normal(ks[12], (H, Dout), stdH),
        b4=uniform(ks[13], (1, Dout), bndH),
    )


_WEIGHT_KEYS = ("w1_s", "w1_p", "w1_o", "w2_s", "w2_p", "w2_o", "w3", "w4")


def stack_layer_params(per_layer):
    """Stack per-layer params on a leading axis; weights -> bf16 (MXU operands),
    biases stay f32 (added to f32 accumulators)."""
    stacked = {}
    for k in per_layer[0]:
        arr = jnp.stack([p[k] for p in per_layer], axis=0)
        if k in _WEIGHT_KEYS:
            arr = arr.astype(jnp.bfloat16)
        stacked[k] = arr
    return stacked


if __name__ == "__main__":
    # Small, lane-friendly shapes: N objects, T triples.
    N, T = 8, 16
    Dobj = Dpred = 128
    H = 128
    Dout = Dobj            # output_dim=None -> Dout == input_dim_obj
    num_layers = 2

    key = jax.random.PRNGKey(0)
    k_obj, k_pred, k_edge, k_params = jax.random.split(key, 4)

    obj_vecs = jax.random.normal(k_obj, (N, Dobj), jnp.float32)
    pred_vecs = jax.random.normal(k_pred, (T, Dpred), jnp.float32)
    edges = jax.random.randint(k_edge, (T, 2), 0, N, jnp.int32)

    layer_keys = jax.random.split(k_params, num_layers)
    params = stack_layer_params(
        [init_layer_params(layer_keys[i], Dobj, Dpred, H, Dout) for i in range(num_layers)])

    # Single-graph forward (matches the PyTorch module's interface).
    new_obj, new_pred = graph_triple_conv_net(obj_vecs, pred_vecs, edges, params)
    jax.block_until_ready((new_obj, new_pred))
    assert new_obj.shape == (N, Dout) and new_pred.shape == (T, Dpred)
    assert bool(jnp.all(jnp.isfinite(new_obj))) and bool(jnp.all(jnp.isfinite(new_pred)))

    # Batched forward: B graphs share one launch; the "parallel" grid axis lets
    # v7x shard graphs across its two TensorCores and amortizes launch overhead.
    B = 2
    kb_obj, kb_pred, kb_edge = jax.random.split(jax.random.PRNGKey(1), 3)
    obj_b = jnp.concatenate(
        [obj_vecs[None], jax.random.normal(kb_obj, (B - 1, N, Dobj), jnp.float32)], axis=0)
    pred_b = jnp.concatenate(
        [pred_vecs[None], jax.random.normal(kb_pred, (B - 1, T, Dpred), jnp.float32)], axis=0)
    edges_b = jnp.concatenate(
        [edges[None], jax.random.randint(kb_edge, (B - 1, T, 2), 0, N, jnp.int32)], axis=0)

    new_obj_b, new_pred_b = graph_triple_conv_net_batched(obj_b, pred_b, edges_b, params)
    jax.block_until_ready((new_obj_b, new_pred_b))
    assert new_obj_b.shape == (B, N, Dout) and new_pred_b.shape == (B, T, Dpred)
    assert bool(jnp.all(jnp.isfinite(new_obj_b))) and bool(jnp.all(jnp.isfinite(new_pred_b)))
    # Graph 0 of the batch must reproduce the single-graph result.
    assert bool(jnp.allclose(new_obj_b[0], new_obj, atol=1e-5, rtol=1e-5))
    assert bool(jnp.allclose(new_pred_b[0], new_pred, atol=1e-5, rtol=1e-5))

    print("KERNEL_OK")
</pallas_src>

<mosaic_0001>
module attributes {stable_mosaic.version = 11 : i64} {
  func.func @_gconvnet_kernel(%arg0: i32, %arg1: memref<1x8x128xf32, #tpu.memory_space<vmem>>, %arg2: memref<1x16x128xf32, #tpu.memory_space<vmem>>, %arg3: memref<1x16x8xbf16, #tpu.memory_space<vmem>>, %arg4: memref<1x16x8xbf16, #tpu.memory_space<vmem>>, %arg5: memref<1x8x16xbf16, #tpu.memory_space<vmem>>, %arg6: memref<1x8x16xbf16, #tpu.memory_space<vmem>>, %arg7: memref<1x8x1xf32, #tpu.memory_space<vmem>>, %arg8: memref<2x128x128xbf16, #tpu.memory_space<vmem>>, %arg9: memref<2x128x128xbf16, #tpu.memory_space<vmem>>, %arg10: memref<2x128x128xbf16, #tpu.memory_space<vmem>>, %arg11: memref<2x1x128xf32, #tpu.memory_space<vmem>>, %arg12: memref<2x128x128xbf16, #tpu.memory_space<vmem>>, %arg13: memref<2x128x128xbf16, #tpu.memory_space<vmem>>, %arg14: memref<2x128x128xbf16, #tpu.memory_space<vmem>>, %arg15: memref<2x1x128xf32, #tpu.memory_space<vmem>>, %arg16: memref<2x1x128xf32, #tpu.memory_space<vmem>>, %arg17: memref<2x1x128xf32, #tpu.memory_space<vmem>>, %arg18: memref<2x128x128xbf16, #tpu.memory_space<vmem>>, %arg19: memref<2x1x128xf32, #tpu.memory_space<vmem>>, %arg20: memref<2x128x128xbf16, #tpu.memory_space<vmem>>, %arg21: memref<2x1x128xf32, #tpu.memory_space<vmem>>, %arg22: memref<1x8x128xf32, #tpu.memory_space<vmem>>, %arg23: memref<1x16x128xf32, #tpu.memory_space<vmem>>) attributes {dimension_semantics = [#tpu.dimension_semantics<parallel>], iteration_bounds = array<i64: 1>, scalar_prefetch = 0 : i64, scratch_operands = 0 : i64, tpu.core_type = #tpu.core_type<tc>, window_params = [{transform_indices = @transform_0, window_bounds = array<i64: 1, 8, 128>}, {transform_indices = @transform_1, window_bounds = array<i64: 1, 16, 128>}, {transform_indices = @transform_2, window_bounds = array<i64: 1, 16, 8>}, {transform_indices = @transform_3, window_bounds = array<i64: 1, 16, 8>}, {transform_indices = @transform_4, window_bounds = array<i64: 1, 8, 16>}, {transform_indices = @transform_5, window_bounds = array<i64: 1, 8, 16>}, {transform_indices = @transform_6, window_bounds = array<i64: 1, 8, 1>}, {pipeline_mode = #tpu.pipeline_mode<synchronous>, transform_indices = @transform_7, window_bounds = array<i64: 2, 128, 128>}, {pipeline_mode = #tpu.pipeline_mode<synchronous>, transform_indices = @transform_8, window_bounds = array<i64: 2, 128, 128>}, {pipeline_mode = #tpu.pipeline_mode<synchronous>, transform_indices = @transform_9, window_bounds = array<i64: 2, 128, 128>}, {pipeline_mode = #tpu.pipeline_mode<synchronous>, transform_indices = @transform_10, window_bounds = array<i64: 2, 1, 128>}, {pipeline_mode = #tpu.pipeline_mode<synchronous>, transform_indices = @transform_11, window_bounds = array<i64: 2, 128, 128>}, {pipeline_mode = #tpu.pipeline_mode<synchronous>, transform_indices = @transform_12, window_bounds = array<i64: 2, 128, 128>}, {pipeline_mode = #tpu.pipeline_mode<synchronous>, transform_indices = @transform_13, window_bounds = array<i64: 2, 128, 128>}, {pipeline_mode = #tpu.pipeline_mode<synchronous>, transform_indices = @transform_14, window_bounds = array<i64: 2, 1, 128>}, {pipeline_mode = #tpu.pipeline_mode<synchronous>, transform_indices = @transform_15, window_bounds = array<i64: 2, 1, 128>}, {pipeline_mode = #tpu.pipeline_mode<synchronous>, transform_indices = @transform_16, window_bounds = array<i64: 2, 1, 128>}, {pipeline_mode = #tpu.pipeline_mode<synchronous>, transform_indices = @transform_17, window_bounds = array<i64: 2, 128, 128>}, {pipeline_mode = #tpu.pipeline_mode<synchronous>, transform_indices = @transform_18, window_bounds = array<i64: 2, 1, 128>}, {pipeline_mode = #tpu.pipeline_mode<synchronous>, transform_indices = @transform_19, window_bounds = array<i64: 2, 128, 128>}, {pipeline_mode = #tpu.pipeline_mode<synchronous>, transform_indices = @transform_20, window_bounds = array<i64: 2, 1, 128>}, {transform_indices = @transform_21, window_bounds = array<i64: 1, 8, 128>}, {transform_indices = @transform_22, window_bounds = array<i64: 1, 16, 128>}]} {
    %c0 = arith.constant 0 : index
    %c0_0 = arith.constant 0 : index
    %c0_1 = arith.constant 0 : index
    %0 = vector.load %arg1[%c0, %c0_0, %c0_1] : memref<1x8x128xf32, #tpu.memory_space<vmem>>, vector<1x8x128xf32>
    %1 = vector.shape_cast %0 : vector<1x8x128xf32> to vector<8x128xf32>
    %2 = arith.truncf %1 : vector<8x128xf32> to vector<8x128xbf16>
    %c0_2 = arith.constant 0 : index
    %c0_3 = arith.constant 0 : index
    %c0_4 = arith.constant 0 : index
    %3 = vector.load %arg2[%c0_2, %c0_3, %c0_4] : memref<1x16x128xf32, #tpu.memory_space<vmem>>, vector<1x16x128xf32>
    %4 = vector.shape_cast %3 : vector<1x16x128xf32> to vector<16x128xf32>
    %c0_5 = arith.constant 0 : index
    %c0_6 = arith.constant 0 : index
    %c0_7 = arith.constant 0 : index
    %5 = vector.load %arg3[%c0_5, %c0_6, %c0_7] : memref<1x16x8xbf16, #tpu.memory_space<vmem>>, vector<1x16x8xbf16>
    %6 = vector.shape_cast %5 : vector<1x16x8xbf16> to vector<16x8xbf16>
    %c0_8 = arith.constant 0 : index
    %c0_9 = arith.constant 0 : index
    %c0_10 = arith.constant 0 : index
    %7 = vector.load %arg4[%c0_8, %c0_9, %c0_10] : memref<1x16x8xbf16, #tpu.memory_space<vmem>>, vector<1x16x8xbf16>
    %8 = vector.shape_cast %7 : vector<1x16x8xbf16> to vector<16x8xbf16>
    %c0_11 = arith.constant 0 : index
    %c0_12 = arith.constant 0 : index
    %c0_13 = arith.constant 0 : index
    %9 = vector.load %arg5[%c0_11, %c0_12, %c0_13] : memref<1x8x16xbf16, #tpu.memory_space<vmem>>, vector<1x8x16xbf16>
    %10 = vector.shape_cast %9 : vector<1x8x16xbf16> to vector<8x16xbf16>
    %c0_14 = arith.constant 0 : index
    %c0_15 = arith.constant 0 : index
    %c0_16 = arith.constant 0 : index
    %11 = vector.load %arg6[%c0_14, %c0_15, %c0_16] : memref<1x8x16xbf16, #tpu.memory_space<vmem>>, vector<1x8x16xbf16>
    %12 = vector.shape_cast %11 : vector<1x8x16xbf16> to vector<8x16xbf16>
    %c0_17 = arith.constant 0 : index
    %c0_18 = arith.constant 0 : index
    %c0_19 = arith.constant 0 : index
    %13 = vector.load %arg7[%c0_17, %c0_18, %c0_19] : memref<1x8x1xf32, #tpu.memory_space<vmem>>, vector<1x8x1xf32>
    %14 = vector.shape_cast %13 : vector<1x8x1xf32> to vector<8x1xf32>
    %c0_20 = arith.constant 0 : index
    %c0_21 = arith.constant 0 : index
    %c0_22 = arith.constant 0 : index
    %15 = vector.load %arg8[%c0_20, %c0_21, %c0_22] : memref<2x128x128xbf16, #tpu.memory_space<vmem>>, vector<1x128x128xbf16>
    %16 = vector.shape_cast %15 : vector<1x128x128xbf16> to vector<128x128xbf16>
    %cst = arith.constant dense<0.000000e+00> : vector<8x128xf32>
    %17 = tpu.matmul %2, %16, %cst {dimension_numbers = #tpu.dot_dimension_numbers<[1], [0], [0], [1], [0, 0, 1, 1], [], []>} : vector<8x128xbf16>, vector<128x128xbf16>, vector<8x128xf32> -> vector<8x128xf32>
    %c0_23 = arith.constant 0 : index
    %c0_24 = arith.constant 0 : index
    %c0_25 = arith.constant 0 : index
    %18 = vector.load %arg10[%c0_23, %c0_24, %c0_25] : memref<2x128x128xbf16, #tpu.memory_space<vmem>>, vector<1x128x128xbf16>
    %19 = vector.shape_cast %18 : vector<1x128x128xbf16> to vector<128x128xbf16>
    %cst_26 = arith.constant dense<0.000000e+00> : vector<8x128xf32>
    %20 = tpu.matmul %2, %19, %cst_26 {dimension_numbers = #tpu.dot_dimension_numbers<[1], [0], [0], [1], [0, 0, 1, 1], [], []>} : vector<8x128xbf16>, vector<128x128xbf16>, vector<8x128xf32> -> vector<8x128xf32>
    %21 = arith.truncf %17 : vector<8x128xf32> to vector<8x128xbf16>
    %cst_27 = arith.constant dense<0.000000e+00> : vector<16x128xf32>
    %22 = tpu.matmul %6, %21, %cst_27 {dimension_numbers = #tpu.dot_dimension_numbers<[1], [0], [0], [1], [0, 0, 1, 1], [], []>} : vector<16x8xbf16>, vector<8x128xbf16>, vector<16x128xf32> -> vector<16x128xf32>
    %23 = arith.truncf %4 : vector<16x128xf32> to vector<16x128xbf16>
    %c0_28 = arith.constant 0 : index
    %c0_29 = arith.constant 0 : index
    %c0_30 = arith.constant 0 : index
    %24 = vector.load %arg9[%c0_28, %c0_29, %c0_30] : memref<2x128x128xbf16, #tpu.memory_space<vmem>>, vector<1x128x128xbf16>
    %25 = vector.shape_cast %24 : vector<1x128x128xbf16> to vector<128x128xbf16>
    %cst_31 = arith.constant dense<0.000000e+00> : vector<16x128xf32>
    %26 = tpu.matmul %23, %25, %cst_31 {dimension_numbers = #tpu.dot_dimension_numbers<[1], [0], [0], [1], [0, 0, 1, 1], [], []>} : vector<16x128xbf16>, vector<128x128xbf16>, vector<16x128xf32> -> vector<16x128xf32>
    %27 = arith.addf %22, %26 : vector<16x128xf32>
    %28 = arith.truncf %20 : vector<8x128xf32> to vector<8x128xbf16>
    %cst_32 = arith.constant dense<0.000000e+00> : vector<16x128xf32>
    %29 = tpu.matmul %8, %28, %cst_32 {dimension_numbers = #tpu.dot_dimension_numbers<[1], [0], [0], [1], [0, 0, 1, 1], [], []>} : vector<16x8xbf16>, vector<8x128xbf16>, vector<16x128xf32> -> vector<16x128xf32>
    %30 = arith.addf %27, %29 : vector<16x128xf32>
    %c0_33 = arith.constant 0 : index
    %c0_34 = arith.constant 0 : index
    %c0_35 = arith.constant 0 : index
    %31 = vector.load %arg11[%c0_33, %c0_34, %c0_35] : memref<2x1x128xf32, #tpu.memory_space<vmem>>, vector<1x1x128xf32>
    %32 = vector.shape_cast %31 : vector<1x1x128xf32> to vector<1x128xf32>
    %33 = vector.broadcast %32 : vector<1x128xf32> to vector<16x128xf32>
    %34 = arith.addf %30, %33 : vector<16x128xf32>
    %cst_36 = arith.constant 0.000000e+00 : f32
    %35 = vector.broadcast %cst_36 : f32 to vector<16x128xf32>
    %36 = arith.maximumf %34, %35 : vector<16x128xf32>
    %37 = arith.truncf %36 : vector<16x128xf32> to vector<16x128xbf16>
    %c0_37 = arith.constant 0 : index
    %c0_38 = arith.constant 0 : index
    %c0_39 = arith.constant 0 : index
    %38 = vector.load %arg12[%c0_37, %c0_38, %c0_39] : memref<2x128x128xbf16, #tpu.memory_space<vmem>>, vector<1x128x128xbf16>
    %39 = vector.shape_cast %38 : vector<1x128x128xbf16> to vector<128x128xbf16>
    %cst_40 = arith.constant dense<0.000000e+00> : vector<16x128xf32>
    %40 = tpu.matmul %37, %39, %cst_40 {dimension_numbers = #tpu.dot_dimension_numbers<[1], [0], [0], [1], [0, 0, 1, 1], [], []>} : vector<16x128xbf16>, vector<128x128xbf16>, vector<16x128xf32> -> vector<16x128xf32>
    %c0_41 = arith.constant 0 : index
    %c0_42 = arith.constant 0 : index
    %c0_43 = arith.constant 0 : index
    %41 = vector.load %arg15[%c0_41, %c0_42, %c0_43] : memref<2x1x128xf32, #tpu.memory_space<vmem>>, vector<1x1x128xf32>
    %42 = vector.shape_cast %41 : vector<1x1x128xf32> to vector<1x128xf32>
    %43 = vector.broadcast %42 : vector<1x128xf32> to vector<16x128xf32>
    %44 = arith.addf %40, %43 : vector<16x128xf32>
    %cst_44 = arith.constant 0.000000e+00 : f32
    %45 = vector.broadcast %cst_44 : f32 to vector<16x128xf32>
    %46 = arith.maximumf %44, %45 : vector<16x128xf32>
    %c0_45 = arith.constant 0 : index
    %c0_46 = arith.constant 0 : index
    %c0_47 = arith.constant 0 : index
    %47 = vector.load %arg13[%c0_45, %c0_46, %c0_47] : memref<2x128x128xbf16, #tpu.memory_space<vmem>>, vector<1x128x128xbf16>
    %48 = vector.shape_cast %47 : vector<1x128x128xbf16> to vector<128x128xbf16>
    %cst_48 = arith.constant dense<0.000000e+00> : vector<16x128xf32>
    %49 = tpu.matmul %37, %48, %cst_48 {dimension_numbers = #tpu.dot_dimension_numbers<[1], [0], [0], [1], [0, 0, 1, 1], [], []>} : vector<16x128xbf16>, vector<128x128xbf16>, vector<16x128xf32> -> vector<16x128xf32>
    %c0_49 = arith.constant 0 : index
    %c0_50 = arith.constant 0 : index
    %c0_51 = arith.constant 0 : index
    %50 = vector.load %arg16[%c0_49, %c0_50, %c0_51] : memref<2x1x128xf32, #tpu.memory_space<vmem>>, vector<1x1x128xf32>
    %51 = vector.shape_cast %50 : vector<1x1x128xf32> to vector<1x128xf32>
    %52 = vector.broadcast %51 : vector<1x128xf32> to vector<16x128xf32>
    %53 = arith.addf %49, %52 : vector<16x128xf32>
    %cst_52 = arith.constant 0.000000e+00 : f32
    %54 = vector.broadcast %cst_52 : f32 to vector<16x128xf32>
    %55 = arith.maximumf %53, %54 : vector<16x128xf32>
    %c0_53 = arith.constant 0 : index
    %c0_54 = arith.constant 0 : index
    %c0_55 = arith.constant 0 : index
    %56 = vector.load %arg14[%c0_53, %c0_54, %c0_55] : memref<2x128x128xbf16, #tpu.memory_space<vmem>>, vector<1x128x128xbf16>
    %57 = vector.shape_cast %56 : vector<1x128x128xbf16> to vector<128x128xbf16>
    %cst_56 = arith.constant dense<0.000000e+00> : vector<16x128xf32>
    %58 = tpu.matmul %37, %57, %cst_56 {dimension_numbers = #tpu.dot_dimension_numbers<[1], [0], [0], [1], [0, 0, 1, 1], [], []>} : vector<16x128xbf16>, vector<128x128xbf16>, vector<16x128xf32> -> vector<16x128xf32>
    %c0_57 = arith.constant 0 : index
    %c0_58 = arith.constant 0 : index
    %c0_59 = arith.constant 0 : index
    %59 = vector.load %arg17[%c0_57, %c0_58, %c0_59] : memref<2x1x128xf32, #tpu.memory_space<vmem>>, vector<1x1x128xf32>
    %60 = vector.shape_cast %59 : vector<1x1x128xf32> to vector<1x128xf32>
    %61 = vector.broadcast %60 : vector<1x128xf32> to vector<16x128xf32>
    %62 = arith.addf %58, %61 : vector<16x128xf32>
    %cst_60 = arith.constant 0.000000e+00 : f32
    %63 = vector.broadcast %cst_60 : f32 to vector<16x128xf32>
    %64 = arith.maximumf %62, %63 : vector<16x128xf32>
    %65 = arith.truncf %46 : vector<16x128xf32> to vector<16x128xbf16>
    %cst_61 = arith.constant dense<0.000000e+00> : vector<8x128xf32>
    %66 = tpu.matmul %10, %65, %cst_61 {dimension_numbers = #tpu.dot_dimension_numbers<[1], [0], [0], [1], [0, 0, 1, 1], [], []>} : vector<8x16xbf16>, vector<16x128xbf16>, vector<8x128xf32> -> vector<8x128xf32>
    %67 = arith.truncf %64 : vector<16x128xf32> to vector<16x128xbf16>
    %cst_62 = arith.constant dense<0.000000e+00> : vector<8x128xf32>
    %68 = tpu.matmul %12, %67, %cst_62 {dimension_numbers = #tpu.dot_dimension_numbers<[1], [0], [0], [1], [0, 0, 1, 1], [], []>} : vector<8x16xbf16>, vector<16x128xbf16>, vector<8x128xf32> -> vector<8x128xf32>
    %69 = arith.addf %66, %68 : vector<8x128xf32>
    %70 = vector.broadcast %14 : vector<8x1xf32> to vector<8x128xf32>
    %71 = arith.mulf %69, %70 : vector<8x128xf32>
    %72 = arith.truncf %71 : vector<8x128xf32> to vector<8x128xbf16>
    %c0_63 = arith.constant 0 : index
    %c0_64 = arith.constant 0 : index
    %c0_65 = arith.constant 0 : index
    %73 = vector.load %arg18[%c0_63, %c0_64, %c0_65] : memref<2x128x128xbf16, #tpu.memory_space<vmem>>, vector<1x128x128xbf16>
    %74 = vector.shape_cast %73 : vector<1x128x128xbf16> to vector<128x128xbf16>
    %cst_66 = arith.constant dense<0.000000e+00> : vector<8x128xf32>
    %75 = tpu.matmul %72, %74, %cst_66 {dimension_numbers = #tpu.dot_dimension_numbers<[1], [0], [0], [1], [0, 0, 1, 1], [], []>} : vector<8x128xbf16>, vector<128x128xbf16>, vector<8x128xf32> -> vector<8x128xf32>
    %c0_67 = arith.constant 0 : index
    %c0_68 = arith.constant 0 : index
    %c0_69 = arith.constant 0 : index
    %76 = vector.load %arg19[%c0_67, %c0_68, %c0_69] : memref<2x1x128xf32, #tpu.memory_space<vmem>>, vector<1x1x128xf32>
    %77 = vector.shape_cast %76 : vector<1x1x128xf32> to vector<1x128xf32>
    %78 = vector.broadcast %77 : vector<1x128xf32> to vector<8x128xf32>
    %79 = arith.addf %75, %78 : vector<8x128xf32>
    %cst_70 = arith.constant 0.000000e+00 : f32
    %80 = vector.broadcast %cst_70 : f32 to vector<8x128xf32>
    %81 = arith.maximumf %79, %80 : vector<8x128xf32>
    %82 = arith.truncf %81 : vector<8x128xf32> to vector<8x128xbf16>
    %c0_71 = arith.constant 0 : index
    %c0_72 = arith.constant 0 : index
    %c0_73 = arith.constant 0 : index
    %83 = vector.load %arg20[%c0_71, %c0_72, %c0_73] : memref<2x128x128xbf16, #tpu.memory_space<vmem>>, vector<1x128x128xbf16>
    %84 = vector.shape_cast %83 : vector<1x128x128xbf16> to vector<128x128xbf16>
    %cst_74 = arith.constant dense<0.000000e+00> : vector<8x128xf32>
    %85 = tpu.matmul %82, %84, %cst_74 {dimension_numbers = #tpu.dot_dimension_numbers<[1], [0], [0], [1], [0, 0, 1, 1], [], []>} : vector<8x128xbf16>, vector<128x128xbf16>, vector<8x128xf32> -> vector<8x128xf32>
    %c0_75 = arith.constant 0 : index
    %c0_76 = arith.constant 0 : index
    %c0_77 = arith.constant 0 : index
    %86 = vector.load %arg21[%c0_75, %c0_76, %c0_77] : memref<2x1x128xf32, #tpu.memory_space<vmem>>, vector<1x1x128xf32>
    %87 = vector.shape_cast %86 : vector<1x1x128xf32> to vector<1x128xf32>
    %88 = vector.broadcast %87 : vector<1x128xf32> to vector<8x128xf32>
    %89 = arith.addf %85, %88 : vector<8x128xf32>
    %cst_78 = arith.constant 0.000000e+00 : f32
    %90 = vector.broadcast %cst_78 : f32 to vector<8x128xf32>
    %91 = arith.maximumf %89, %90 : vector<8x128xf32>
    %92 = arith.truncf %91 : vector<8x128xf32> to vector<8x128xbf16>
    %c1 = arith.constant 1 : index
    %c0_79 = arith.constant 0 : index
    %c0_80 = arith.constant 0 : index
    %93 = vector.load %arg8[%c1, %c0_79, %c0_80] : memref<2x128x128xbf16, #tpu.memory_space<vmem>>, vector<1x128x128xbf16>
    %94 = vector.shape_cast %93 : vector<1x128x128xbf16> to vector<128x128xbf16>
    %cst_81 = arith.constant dense<0.000000e+00> : vector<8x128xf32>
    %95 = tpu.matmul %92, %94, %cst_81 {dimension_numbers = #tpu.dot_dimension_numbers<[1], [0], [0], [1], [0, 0, 1, 1], [], []>} : vector<8x128xbf16>, vector<128x128xbf16>, vector<8x128xf32> -> vector<8x128xf32>
    %c1_82 = arith.constant 1 : index
    %c0_83 = arith.constant 0 : index
    %c0_84 = arith.constant 0 : index
    %96 = vector.load %arg10[%c1_82, %c0_83, %c0_84] : memref<2x128x128xbf16, #tpu.memory_space<vmem>>, vector<1x128x128xbf16>
    %97 = vector.shape_cast %96 : vector<1x128x128xbf16> to vector<128x128xbf16>
    %cst_85 = arith.constant dense<0.000000e+00> : vector<8x128xf32>
    %98 = tpu.matmul %92, %97, %cst_85 {dimension_numbers = #tpu.dot_dimension_numbers<[1], [0], [0], [1], [0, 0, 1, 1], [], []>} : vector<8x128xbf16>, vector<128x128xbf16>, vector<8x128xf32> -> vector<8x128xf32>
    %99 = arith.truncf %95 : vector<8x128xf32> to vector<8x128xbf16>
    %cst_86 = arith.constant dense<0.000000e+00> : vector<16x128xf32>
    %100 = tpu.matmul %6, %99, %cst_86 {dimension_numbers = #tpu.dot_dimension_numbers<[1], [0], [0], [1], [0, 0, 1, 1], [], []>} : vector<16x8xbf16>, vector<8x128xbf16>, vector<16x128xf32> -> vector<16x128xf32>
    %101 = arith.truncf %55 : vector<16x128xf32> to vector<16x128xbf16>
    %c1_87 = arith.constant 1 : index
    %c0_88 = arith.constant 0 : index
    %c0_89 = arith.constant 0 : index
    %102 = vector.load %arg9[%c1_87, %c0_88, %c0_89] : memref<2x128x128xbf16, #tpu.memory_space<vmem>>, vector<1x128x128xbf16>
    %103 = vector.shape_cast %102 : vector<1x128x128xbf16> to vector<128x128xbf16>
    %cst_90 = arith.constant dense<0.000000e+00> : vector<16x128xf32>
    %104 = tpu.matmul %101, %103, %cst_90 {dimension_numbers = #tpu.dot_dimension_numbers<[1], [0], [0], [1], [0, 0, 1, 1], [], []>} : vector<16x128xbf16>, vector<128x128xbf16>, vector<16x128xf32> -> vector<16x128xf32>
    %105 = arith.addf %100, %104 : vector<16x128xf32>
    %106 = arith.truncf %98 : vector<8x128xf32> to vector<8x128xbf16>
    %cst_91 = arith.constant dense<0.000000e+00> : vector<16x128xf32>
    %107 = tpu.matmul %8, %106, %cst_91 {dimension_numbers = #tpu.dot_dimension_numbers<[1], [0], [0], [1], [0, 0, 1, 1], [], []>} : vector<16x8xbf16>, vector<8x128xbf16>, vector<16x128xf32> -> vector<16x128xf32>
    %108 = arith.addf %105, %107 : vector<16x128xf32>
    %c1_92 = arith.constant 1 : index
    %c0_93 = arith.constant 0 : index
    %c0_94 = arith.constant 0 : index
    %109 = vector.load %arg11[%c1_92, %c0_93, %c0_94] : memref<2x1x128xf32, #tpu.memory_space<vmem>>, vector<1x1x128xf32>
    %110 = vector.shape_cast %109 : vector<1x1x128xf32> to vector<1x128xf32>
    %111 = vector.broadcast %110 : vector<1x128xf32> to vector<16x128xf32>
    %112 = arith.addf %108, %111 : vector<16x128xf32>
    %cst_95 = arith.constant 0.000000e+00 : f32
    %113 = vector.broadcast %cst_95 : f32 to vector<16x128xf32>
    %114 = arith.maximumf %112, %113 : vector<16x128xf32>
    %115 = arith.truncf %114 : vector<16x128xf32> to vector<16x128xbf16>
    %c1_96 = arith.constant 1 : index
    %c0_97 = arith.constant 0 : index
    %c0_98 = arith.constant 0 : index
    %116 = vector.load %arg12[%c1_96, %c0_97, %c0_98] : memref<2x128x128xbf16, #tpu.memory_space<vmem>>, vector<1x128x128xbf16>
    %117 = vector.shape_cast %116 : vector<1x128x128xbf16> to vector<128x128xbf16>
    %cst_99 = arith.constant dense<0.000000e+00> : vector<16x128xf32>
    %118 = tpu.matmul %115, %117, %cst_99 {dimension_numbers = #tpu.dot_dimension_numbers<[1], [0], [0], [1], [0, 0, 1, 1], [], []>} : vector<16x128xbf16>, vector<128x128xbf16>, vector<16x128xf32> -> vector<16x128xf32>
    %c1_100 = arith.constant 1 : index
    %c0_101 = arith.constant 0 : index
    %c0_102 = arith.constant 0 : index
    %119 = vector.load %arg15[%c1_100, %c0_101, %c0_102] : memref<2x1x128xf32, #tpu.memory_space<vmem>>, vector<1x1x128xf32>
    %120 = vector.shape_cast %119 : vector<1x1x128xf32> to vector<1x128xf32>
    %121 = vector.broadcast %120 : vector<1x128xf32> to vector<16x128xf32>
    %122 = arith.addf %118, %121 : vector<16x128xf32>
    %cst_103 = arith.constant 0.000000e+00 : f32
    %123 = vector.broadcast %cst_103 : f32 to vector<16x128xf32>
    %124 = arith.maximumf %122, %123 : vector<16x128xf32>
    %c1_104 = arith.constant 1 : index
    %c0_105 = arith.constant 0 : index
    %c0_106 = arith.constant 0 : index
    %125 = vector.load %arg13[%c1_104, %c0_105, %c0_106] : memref<2x128x128xbf16, #tpu.memory_space<vmem>>, vector<1x128x128xbf16>
    %126 = vector.shape_cast %125 : vector<1x128x128xbf16> to vector<128x128xbf16>
    %cst_107 = arith.constant dense<0.000000e+00> : vector<16x128xf32>
    %127 = tpu.matmul %115, %126, %cst_107 {dimension_numbers = #tpu.dot_dimension_numbers<[1], [0], [0], [1], [0, 0, 1, 1], [], []>} : vector<16x128xbf16>, vector<128x128xbf16>, vector<16x128xf32> -> vector<16x128xf32>
    %c1_108 = arith.constant 1 : index
    %c0_109 = arith.constant 0 : index
    %c0_110 = arith.constant 0 : index
    %128 = vector.load %arg16[%c1_108, %c0_109, %c0_110] : memref<2x1x128xf32, #tpu.memory_space<vmem>>, vector<1x1x128xf32>
    %129 = vector.shape_cast %128 : vector<1x1x128xf32> to vector<1x128xf32>
    %130 = vector.broadcast %129 : vector<1x128xf32> to vector<16x128xf32>
    %131 = arith.addf %127, %130 : vector<16x128xf32>
    %cst_111 = arith.constant 0.000000e+00 : f32
    %132 = vector.broadcast %cst_111 : f32 to vector<16x128xf32>
    %133 = arith.maximumf %131, %132 : vector<16x128xf32>
    %c1_112 = arith.constant 1 : index
    %c0_113 = arith.constant 0 : index
    %c0_114 = arith.constant 0 : index
    %134 = vector.load %arg14[%c1_112, %c0_113, %c0_114] : memref<2x128x128xbf16, #tpu.memory_space<vmem>>, vector<1x128x128xbf16>
    %135 = vector.shape_cast %134 : vector<1x128x128xbf16> to vector<128x128xbf16>
    %cst_115 = arith.constant dense<0.000000e+00> : vector<16x128xf32>
    %136 = tpu.matmul %115, %135, %cst_115 {dimension_numbers = #tpu.dot_dimension_numbers<[1], [0], [0], [1], [0, 0, 1, 1], [], []>} : vector<16x128xbf16>, vector<128x128xbf16>, vector<16x128xf32> -> vector<16x128xf32>
    %c1_116 = arith.constant 1 : index
    %c0_117 = arith.constant 0 : index
    %c0_118 = arith.constant 0 : index
    %137 = vector.load %arg17[%c1_116, %c0_117, %c0_118] : memref<2x1x128xf32, #tpu.memory_space<vmem>>, vector<1x1x128xf32>
    %138 = vector.shape_cast %137 : vector<1x1x128xf32> to vector<1x128xf32>
    %139 = vector.broadcast %138 : vector<1x128xf32> to vector<16x128xf32>
    %140 = arith.addf %136, %139 : vector<16x128xf32>
    %cst_119 = arith.constant 0.000000e+00 : f32
    %141 = vector.broadcast %cst_119 : f32 to vector<16x128xf32>
    %142 = arith.maximumf %140, %141 : vector<16x128xf32>
    %143 = arith.truncf %124 : vector<16x128xf32> to vector<16x128xbf16>
    %cst_120 = arith.constant dense<0.000000e+00> : vector<8x128xf32>
    %144 = tpu.matmul %10, %143, %cst_120 {dimension_numbers = #tpu.dot_dimension_numbers<[1], [0], [0], [1], [0, 0, 1, 1], [], []>} : vector<8x16xbf16>, vector<16x128xbf16>, vector<8x128xf32> -> vector<8x128xf32>
    %145 = arith.truncf %142 : vector<16x128xf32> to vector<16x128xbf16>
    %cst_121 = arith.constant dense<0.000000e+00> : vector<8x128xf32>
    %146 = tpu.matmul %12, %145, %cst_121 {dimension_numbers = #tpu.dot_dimension_numbers<[1], [0], [0], [1], [0, 0, 1, 1], [], []>} : vector<8x16xbf16>, vector<16x128xbf16>, vector<8x128xf32> -> vector<8x128xf32>
    %147 = arith.addf %144, %146 : vector<8x128xf32>
    %148 = vector.broadcast %14 : vector<8x1xf32> to vector<8x128xf32>
    %149 = arith.mulf %147, %148 : vector<8x128xf32>
    %150 = arith.truncf %149 : vector<8x128xf32> to vector<8x128xbf16>
    %c1_122 = arith.constant 1 : index
    %c0_123 = arith.constant 0 : index
    %c0_124 = arith.constant 0 : index
    %151 = vector.load %arg18[%c1_122, %c0_123, %c0_124] : memref<2x128x128xbf16, #tpu.memory_space<vmem>>, vector<1x128x128xbf16>
    %152 = vector.shape_cast %151 : vector<1x128x128xbf16> to vector<128x128xbf16>
    %cst_125 = arith.constant dense<0.000000e+00> : vector<8x128xf32>
    %153 = tpu.matmul %150, %152, %cst_125 {dimension_numbers = #tpu.dot_dimension_numbers<[1], [0], [0], [1], [0, 0, 1, 1], [], []>} : vector<8x128xbf16>, vector<128x128xbf16>, vector<8x128xf32> -> vector<8x128xf32>
    %c1_126 = arith.constant 1 : index
    %c0_127 = arith.constant 0 : index
    %c0_128 = arith.constant 0 : index
    %154 = vector.load %arg19[%c1_126, %c0_127, %c0_128] : memref<2x1x128xf32, #tpu.memory_space<vmem>>, vector<1x1x128xf32>
    %155 = vector.shape_cast %154 : vector<1x1x128xf32> to vector<1x128xf32>
    %156 = vector.broadcast %155 : vector<1x128xf32> to vector<8x128xf32>
    %157 = arith.addf %153, %156 : vector<8x128xf32>
    %cst_129 = arith.constant 0.000000e+00 : f32
    %158 = vector.broadcast %cst_129 : f32 to vector<8x128xf32>
    %159 = arith.maximumf %157, %158 : vector<8x128xf32>
    %160 = arith.truncf %159 : vector<8x128xf32> to vector<8x128xbf16>
    %c1_130 = arith.constant 1 : index
    %c0_131 = arith.constant 0 : index
    %c0_132 = arith.constant 0 : index
    %161 = vector.load %arg20[%c1_130, %c0_131, %c0_132] : memref<2x128x128xbf16, #tpu.memory_space<vmem>>, vector<1x128x128xbf16>
    %162 = vector.shape_cast %161 : vector<1x128x128xbf16> to vector<128x128xbf16>
    %cst_133 = arith.constant dense<0.000000e+00> : vector<8x128xf32>
    %163 = tpu.matmul %160, %162, %cst_133 {dimension_numbers = #tpu.dot_dimension_numbers<[1], [0], [0], [1], [0, 0, 1, 1], [], []>} : vector<8x128xbf16>, vector<128x128xbf16>, vector<8x128xf32> -> vector<8x128xf32>
    %c1_134 = arith.constant 1 : index
    %c0_135 = arith.constant 0 : index
    %c0_136 = arith.constant 0 : index
    %164 = vector.load %arg21[%c1_134, %c0_135, %c0_136] : memref<2x1x128xf32, #tpu.memory_space<vmem>>, vector<1x1x128xf32>
    %165 = vector.shape_cast %164 : vector<1x1x128xf32> to vector<1x128xf32>
    %166 = vector.broadcast %165 : vector<1x128xf32> to vector<8x128xf32>
    %167 = arith.addf %163, %166 : vector<8x128xf32>
    %cst_137 = arith.constant 0.000000e+00 : f32
    %168 = vector.broadcast %cst_137 : f32 to vector<8x128xf32>
    %169 = arith.maximumf %167, %168 : vector<8x128xf32>
    %c0_138 = arith.constant 0 : index
    %c0_139 = arith.constant 0 : index
    %c0_140 = arith.constant 0 : index
    %170 = vector.load %arg22[%c0_138, %c0_139, %c0_140] : memref<1x8x128xf32, #tpu.memory_space<vmem>>, vector<1x8x128xf32>
    %171 = vector.shape_cast %170 : vector<1x8x128xf32> to vector<8x128xf32>
    %172 = vector.shape_cast %169 : vector<8x128xf32> to vector<1x8x128xf32>
    tpu.vector_store %arg22[%c0_138, %c0_139, %c0_140], %172 {strides = array<i32>} : memref<1x8x128xf32, #tpu.memory_space<vmem>>, vector<1x8x128xf32>,
    %c0_141 = arith.constant 0 : index
    %c0_142 = arith.constant 0 : index
    %c0_143 = arith.constant 0 : index
    %173 = vector.load %arg23[%c0_141, %c0_142, %c0_143] : memref<1x16x128xf32, #tpu.memory_space<vmem>>, vector<1x16x128xf32>
    %174 = vector.shape_cast %173 : vector<1x16x128xf32> to vector<16x128xf32>
    %175 = vector.shape_cast %133 : vector<16x128xf32> to vector<1x16x128xf32>
    tpu.vector_store %arg23[%c0_141, %c0_142, %c0_143], %175 {strides = array<i32>} : memref<1x16x128xf32, #tpu.memory_space<vmem>>, vector<1x16x128xf32>,
    return
  }
  func.func @transform_0(%arg0: i32) -> (i32, i32, i32) {
    %c0_i32 = arith.constant 0 : i32
    %c0_i32_0 = arith.constant 0 : i32
    %c0_i32_1 = arith.constant 0 : i32
    return %arg0, %c0_i32, %c0_i32_0 : i32, i32, i32
  }
  func.func @transform_1(%arg0: i32) -> (i32, i32, i32) {
    %c0_i32 = arith.constant 0 : i32
    %c0_i32_0 = arith.constant 0 : i32
    %c0_i32_1 = arith.constant 0 : i32
    return %arg0, %c0_i32, %c0_i32_0 : i32, i32, i32
  }
  func.func @transform_2(%arg0: i32) -> (i32, i32, i32) {
    %c0_i32 = arith.constant 0 : i32
    %c0_i32_0 = arith.constant 0 : i32
    %c0_i32_1 = arith.constant 0 : i32
    return %arg0, %c0_i32, %c0_i32_0 : i32, i32, i32
  }
  func.func @transform_3(%arg0: i32) -> (i32, i32, i32) {
    %c0_i32 = arith.constant 0 : i32
    %c0_i32_0 = arith.constant 0 : i32
    %c0_i32_1 = arith.constant 0 : i32
    return %arg0, %c0_i32, %c0_i32_0 : i32, i32, i32
  }
  func.func @transform_4(%arg0: i32) -> (i32, i32, i32) {
    %c0_i32 = arith.constant 0 : i32
    %c0_i32_0 = arith.constant 0 : i32
    %c0_i32_1 = arith.constant 0 : i32
    return %arg0, %c0_i32, %c0_i32_0 : i32, i32, i32
  }
  func.func @transform_5(%arg0: i32) -> (i32, i32, i32) {
    %c0_i32 = arith.constant 0 : i32
    %c0_i32_0 = arith.constant 0 : i32
    %c0_i32_1 = arith.constant 0 : i32
    return %arg0, %c0_i32, %c0_i32_0 : i32, i32, i32
  }
  func.func @transform_6(%arg0: i32) -> (i32, i32, i32) {
    %c0_i32 = arith.constant 0 : i32
    %c0_i32_0 = arith.constant 0 : i32
    %c0_i32_1 = arith.constant 0 : i32
    return %arg0, %c0_i32, %c0_i32_0 : i32, i32, i32
  }
  func.func @transform_7(%arg0: i32) -> (i32, i32, i32) {
    %c0_i32 = arith.constant 0 : i32
    %c0_i32_0 = arith.constant 0 : i32
    %c0_i32_1 = arith.constant 0 : i32
    %c0_i32_2 = arith.constant 0 : i32
    return %c0_i32, %c0_i32_0, %c0_i32_1 : i32, i32, i32
  }
  func.func @transform_8(%arg0: i32) -> (i32, i32, i32) {
    %c0_i32 = arith.constant 0 : i32
    %c0_i32_0 = arith.constant 0 : i32
    %c0_i32_1 = arith.constant 0 : i32
    %c0_i32_2 = arith.constant 0 : i32
    return %c0_i32, %c0_i32_0, %c0_i32_1 : i32, i32, i32
  }
  func.func @transform_9(%arg0: i32) -> (i32, i32, i32) {
    %c0_i32 = arith.constant 0 : i32
    %c0_i32_0 = arith.constant 0 : i32
    %c0_i32_1 = arith.constant 0 : i32
    %c0_i32_2 = arith.constant 0 : i32
    return %c0_i32, %c0_i32_0, %c0_i32_1 : i32, i32, i32
  }
  func.func @transform_10(%arg0: i32) -> (i32, i32, i32) {
    %c0_i32 = arith.constant 0 : i32
    %c0_i32_0 = arith.constant 0 : i32
    %c0_i32_1 = arith.constant 0 : i32
    %c0_i32_2 = arith.constant 0 : i32
    return %c0_i32, %c0_i32_0, %c0_i32_1 : i32, i32, i32
  }
  func.func @transform_11(%arg0: i32) -> (i32, i32, i32) {
    %c0_i32 = arith.constant 0 : i32
    %c0_i32_0 = arith.constant 0 : i32
    %c0_i32_1 = arith.constant 0 : i32
    %c0_i32_2 = arith.constant 0 : i32
    return %c0_i32, %c0_i32_0, %c0_i32_1 : i32, i32, i32
  }
  func.func @transform_12(%arg0: i32) -> (i32, i32, i32) {
    %c0_i32 = arith.constant 0 : i32
    %c0_i32_0 = arith.constant 0 : i32
    %c0_i32_1 = arith.constant 0 : i32
    %c0_i32_2 = arith.constant 0 : i32
    return %c0_i32, %c0_i32_0, %c0_i32_1 : i32, i32, i32
  }
  func.func @transform_13(%arg0: i32) -> (i32, i32, i32) {
    %c0_i32 = arith.constant 0 : i32
    %c0_i32_0 = arith.constant 0 : i32
    %c0_i32_1 = arith.constant 0 : i32
    %c0_i32_2 = arith.constant 0 : i32
    return %c0_i32, %c0_i32_0, %c0_i32_1 : i32, i32, i32
  }
  func.func @transform_14(%arg0: i32) -> (i32, i32, i32) {
    %c0_i32 = arith.constant 0 : i32
    %c0_i32_0 = arith.constant 0 : i32
    %c0_i32_1 = arith.constant 0 : i32
    %c0_i32_2 = arith.constant 0 : i32
    return %c0_i32, %c0_i32_0, %c0_i32_1 : i32, i32, i32
  }
  func.func @transform_15(%arg0: i32) -> (i32, i32, i32) {
    %c0_i32 = arith.constant 0 : i32
    %c0_i32_0 = arith.constant 0 : i32
    %c0_i32_1 = arith.constant 0 : i32
    %c0_i32_2 = arith.constant 0 : i32
    return %c0_i32, %c0_i32_0, %c0_i32_1 : i32, i32, i32
  }
  func.func @transform_16(%arg0: i32) -> (i32, i32, i32) {
    %c0_i32 = arith.constant 0 : i32
    %c0_i32_0 = arith.constant 0 : i32
    %c0_i32_1 = arith.constant 0 : i32
    %c0_i32_2 = arith.constant 0 : i32
    return %c0_i32, %c0_i32_0, %c0_i32_1 : i32, i32, i32
  }
  func.func @transform_17(%arg0: i32) -> (i32, i32, i32) {
    %c0_i32 = arith.constant 0 : i32
    %c0_i32_0 = arith.constant 0 : i32
    %c0_i32_1 = arith.constant 0 : i32
    %c0_i32_2 = arith.constant 0 : i32
    return %c0_i32, %c0_i32_0, %c0_i32_1 : i32, i32, i32
  }
  func.func @transform_18(%arg0: i32) -> (i32, i32, i32) {
    %c0_i32 = arith.constant 0 : i32
    %c0_i32_0 = arith.constant 0 : i32
    %c0_i32_1 = arith.constant 0 : i32
    %c0_i32_2 = arith.constant 0 : i32
    return %c0_i32, %c0_i32_0, %c0_i32_1 : i32, i32, i32
  }
  func.func @transform_19(%arg0: i32) -> (i32, i32, i32) {
    %c0_i32 = arith.constant 0 : i32
    %c0_i32_0 = arith.constant 0 : i32
    %c0_i32_1 = arith.constant 0 : i32
    %c0_i32_2 = arith.constant 0 : i32
    return %c0_i32, %c0_i32_0, %c0_i32_1 : i32, i32, i32
  }
  func.func @transform_20(%arg0: i32) -> (i32, i32, i32) {
    %c0_i32 = arith.constant 0 : i32
    %c0_i32_0 = arith.constant 0 : i32
    %c0_i32_1 = arith.constant 0 : i32
    %c0_i32_2 = arith.constant 0 : i32
    return %c0_i32, %c0_i32_0, %c0_i32_1 : i32, i32, i32
  }
  func.func @transform_21(%arg0: i32) -> (i32, i32, i32) {
    %c0_i32 = arith.constant 0 : i32
    %c0_i32_0 = arith.constant 0 : i32
    %c0_i32_1 = arith.constant 0 : i32
    return %arg0, %c0_i32, %c0_i32_0 : i32, i32, i32
  }
  func.func @transform_22(%arg0: i32) -> (i32, i32, i32) {
    %c0_i32 = arith.constant 0 : i32
    %c0_i32_0 = arith.constant 0 : i32
    %c0_i32_1 = arith.constant 0 : i32
    return %arg0, %c0_i32, %c0_i32_0 : i32, i32, i32
  }
}

</mosaic_0001>

<llo_original>
// kernel: tpu_custom_call.1
$region0: #{tpu_custom_call.1}
  #allocation0 [shape = 'u32[]', space=smem, size = 0x4, offset = 0x4, fixed_abs, tag = 'smem constant byte address 0x4 - core index']
  #allocation1 [shape = 'u32[144,128]{1,0:T(1,128)}', space=vmem, size = 0x12000, scoped, tag = 'internal scratch']
  %s0 = inlined_call_operand.vmem [shape: f32[1,8,128], index: 0, kind: input, shape index: {}]
  %s1 = inlined_call_operand.vmem [shape: f32[1,16,128], index: 1, kind: input, shape index: {}]
  %s2 = inlined_call_operand.vmem [shape: bf16[1,16,8], index: 2, kind: input, shape index: {}]
  %s3 = inlined_call_operand.vmem [shape: bf16[1,16,8], index: 3, kind: input, shape index: {}]
  %s4 = inlined_call_operand.vmem [shape: bf16[1,8,16], index: 4, kind: input, shape index: {}]
  %s5 = inlined_call_operand.vmem [shape: bf16[1,8,16], index: 5, kind: input, shape index: {}]
  %s6 = inlined_call_operand.vmem [shape: f32[1,8,1], index: 6, kind: input, shape index: {}]
  %s7 = inlined_call_operand.hbm [shape: bf16[2,128,128], index: 7, kind: input, shape index: {}]
  %s8 = inlined_call_operand.hbm [shape: bf16[2,128,128], index: 8, kind: input, shape index: {}]
  %s9 = inlined_call_operand.hbm [shape: bf16[2,128,128], index: 9, kind: input, shape index: {}]
  %s10 = inlined_call_operand.vmem [shape: f32[2,1,128], index: 10, kind: input, shape index: {}]
  %s11 = inlined_call_operand.hbm [shape: bf16[2,128,128], index: 11, kind: input, shape index: {}]
  %s12 = inlined_call_operand.hbm [shape: bf16[2,128,128], index: 12, kind: input, shape index: {}]
  %s13 = inlined_call_operand.hbm [shape: bf16[2,128,128], index: 13, kind: input, shape index: {}]
  %s14 = inlined_call_operand.vmem [shape: f32[2,1,128], index: 14, kind: input, shape index: {}]
  %s15 = inlined_call_operand.vmem [shape: f32[2,1,128], index: 15, kind: input, shape index: {}]
  %s16 = inlined_call_operand.vmem [shape: f32[2,1,128], index: 16, kind: input, shape index: {}]
  %s17 = inlined_call_operand.hbm [shape: bf16[2,128,128], index: 17, kind: input, shape index: {}]
  %s18 = inlined_call_operand.vmem [shape: f32[2,1,128], index: 18, kind: input, shape index: {}]
  %s19 = inlined_call_operand.hbm [shape: bf16[2,128,128], index: 19, kind: input, shape index: {}]
  %s20 = inlined_call_operand.vmem [shape: f32[2,1,128], index: 20, kind: input, shape index: {}]
  %s21 = inlined_call_operand.hbm [shape: f32[1,8,128], index: 21, kind: output, shape index: {0}]
  %s22 = inlined_call_operand.hbm [shape: f32[1,16,128], index: 22, kind: output, shape index: {1}]
  %23 = xla_tuple %s21, %s22
  %s24 = sld [smem:[#allocation0]]
  $region134: #{tpu_custom_call.1} parent=0
    _
  %s26 = ssub.s32 1, %s24
  %s27 = scalar_select 0, %s26, %s24
  $region1: #{tpu_custom_call.1} parent=0
    #allocation2 [shape = 'u8[65536]{0}', space=vmem, size = 0x10000, scoped, tag = 'input window, operand 7, single buffered']
    #allocation3 [shape = 's32[1]{0}', space=sflag, size = 0x4, scoped, tag = 'scoped memory for tpu_custom_call.1']
    #allocation4 [shape = 's32[1]{0}', space=sflag, size = 0x4, scoped, tag = 'scoped memory for tpu_custom_call.1']
    #allocation5 [shape = 'u8[65536]{0}', space=vmem, size = 0x10000, scoped, tag = 'input window, operand 8, single buffered']
    #allocation6 [shape = 's32[1]{0}', space=sflag, size = 0x4, scoped, tag = 'scoped memory for tpu_custom_call.1']
    #allocation7 [shape = 'u8[65536]{0}', space=vmem, size = 0x10000, scoped, tag = 'input window, operand 9, single buffered']
    #allocation8 [shape = 'u8[65536]{0}', space=vmem, size = 0x10000, scoped, tag = 'input window, operand 11, single buffered']
    #allocation9 [shape = 's32[1]{0}', space=sflag, size = 0x4, scoped, tag = 'scoped memory for tpu_custom_call.1']
    #allocation10 [shape = 'u8[65536]{0}', space=vmem, size = 0x10000, scoped, tag = 'input window, operand 12, single buffered']
    #allocation11 [shape = 'u8[65536]{0}', space=vmem, size = 0x10000, scoped, tag = 'input window, operand 13, single buffered']
    #allocation12 [shape = 's32[1]{0}', space=sflag, size = 0x4, scoped, tag = 'scoped memory for tpu_custom_call.1']
    #allocation13 [shape = 'u8[65536]{0}', space=vmem, size = 0x10000, scoped, tag = 'input window, operand 17, single buffered']
    #allocation14 [shape = 'u8[65536]{0}', space=vmem, size = 0x10000, scoped, tag = 'input window, operand 19, single buffered']
    #allocation15 [shape = 's32[1]{0}', space=sflag, size = 0x4, scoped, tag = 'scoped memory for tpu_custom_call.1']
    #allocation16 [shape = 'u8[4096]{0}', space=vmem, size = 0x1000, scoped, tag = 'output window, operand 0, single buffered']
    #allocation17 [shape = 'u8[8192]{0}', space=vmem, size = 0x2000, scoped, tag = 'output window, operand 1, single buffered']
    #allocation18 [shape = 's32[1]{0}', space=sflag, size = 0x4, scoped, tag = 'scoped memory for tpu_custom_call.1']
    %28 = vsyncpa [#allocation3], 0
    %29 = vsyncpa [#allocation6], 0
    %30 = vsyncpa [#allocation9], 0
    %31 = vsyncpa [#allocation12], 0
    %32 = vsyncpa [#allocation15], 0
    %33 = vsyncpa [#allocation4], 0
    %34 = vsyncpa [#allocation18], 0
    // Predicated region
    $region2: #{tpu_custom_call.1} parent=1 // pred_check
      _
    $region3: #{tpu_custom_call.1} parent=1 // pred_check_branch
      %36 = sbr.rel (0) target = $region5
    $region4: #{tpu_custom_call.1} parent=1 // pred_region
      _
    $region5: #{tpu_custom_call.1} parent=1 // pred_fallthru
      _
    // Predicated region
    $region6: #{tpu_custom_call.1} parent=1 // pred_check
      _
    $region7: #{tpu_custom_call.1} parent=1 // pred_check_branch
      %38 = sbr.rel (0) target = $region9
    $region8: #{tpu_custom_call.1} parent=1 // pred_region
      _
    $region9: #{tpu_custom_call.1} parent=1 // pred_fallthru
      _
    // Predicated region
    $region10: #{tpu_custom_call.1} parent=1 // pred_check
      _
    $region11: #{tpu_custom_call.1} parent=1 // pred_check_branch
      %40 = sbr.rel (0) target = $region13
    $region12: #{tpu_custom_call.1} parent=1 // pred_region
      _
    $region13: #{tpu_custom_call.1} parent=1 // pred_fallthru
      _
    // Predicated region
    $region14: #{tpu_custom_call.1} parent=1 // pred_check
      _
    $region15: #{tpu_custom_call.1} parent=1 // pred_check_branch
      %42 = sbr.rel (0) target = $region17
    $region16: #{tpu_custom_call.1} parent=1 // pred_region
      _
    $region17: #{tpu_custom_call.1} parent=1 // pred_fallthru
      _
    // Predicated region
    $region18: #{tpu_custom_call.1} parent=1 // pred_check
      _
    $region19: #{tpu_custom_call.1} parent=1 // pred_check_branch
      %44 = sbr.rel (0) target = $region21
    $region20: #{tpu_custom_call.1} parent=1 // pred_region
      _
    $region21: #{tpu_custom_call.1} parent=1 // pred_fallthru
      _
    // Predicated region
    $region22: #{tpu_custom_call.1} parent=1 // pred_check
      _
    $region23: #{tpu_custom_call.1} parent=1 // pred_check_branch
      %46 = sbr.rel (0) target = $region25
    $region24: #{tpu_custom_call.1} parent=1 // pred_region
      _
    $region25: #{tpu_custom_call.1} parent=1 // pred_fallthru
      _
    // Predicated region
    $region26: #{tpu_custom_call.1} parent=1 // pred_check
      _
    $region27: #{tpu_custom_call.1} parent=1 // pred_check_branch
      %48 = sbr.rel (0) target = $region29
    $region28: #{tpu_custom_call.1} parent=1 // pred_region
      _
    $region29: #{tpu_custom_call.1} parent=1 // pred_fallthru
      _
    // Predicated region
    $region30: #{tpu_custom_call.1} parent=1 // pred_check
      _
    $region31: #{tpu_custom_call.1} parent=1 // pred_check_branch
      %50 = sbr.rel (0) target = $region33
    $region32: #{tpu_custom_call.1} parent=1 // pred_region
      %s52 = ssub.s32 2048, 2048
      %53 = vsyncadd [#allocation3], %s52
      %s54 = sshll.u32 [#allocation2], 4
      %s55 = int_to_ptr.vmem [resolvable:$true] %s54
      %60 = dma.hbm_to_vmem [thread:$0]  %s7, 2048, %s55, [#allocation3], 64, 64, 4
    $region33: #{tpu_custom_call.1} parent=1 // pred_fallthru
      _
    // Predicated region
    $region34: #{tpu_custom_call.1} parent=1 // pred_check
      _
    $region35: #{tpu_custom_call.1} parent=1 // pred_check_branch
      %62 = sbr.rel (0) target = $region37
    $region36: #{tpu_custom_call.1} parent=1 // pred_region
      %s64 = ssub.s32 2048, 2048
      %65 = vsyncadd [#allocation6], %s64
      %s66 = sshll.u32 [#allocation5], 4
      %s67 = int_to_ptr.vmem [resolvable:$true] %s66
      %72 = dma.hbm_to_vmem [thread:$0]  %s8, 2048, %s67, [#allocation6], 64, 64, 4
    $region37: #{tpu_custom_call.1} parent=1 // pred_fallthru
      _
    // Predicated region
    $region38: #{tpu_custom_call.1} parent=1 // pred_check
      _
    $region39: #{tpu_custom_call.1} parent=1 // pred_check_branch
      %74 = sbr.rel (0) target = $region41
    $region40: #{tpu_custom_call.1} parent=1 // pred_region
      %s76 = ssub.s32 2048, 2048
      %77 = vsyncadd [#allocation6], %s76
      %s78 = sshll.u32 [#allocation7], 4
      %s79 = int_to_ptr.vmem [resolvable:$true] %s78
      %84 = dma.hbm_to_vmem [thread:$0]  %s9, 2048, %s79, [#allocation6], 64, 64, 4
    $region41: #{tpu_custom_call.1} parent=1 // pred_fallthru
      _
    // Predicated region
    $region42: #{tpu_custom_call.1} parent=1 // pred_check
      _
    $region43: #{tpu_custom_call.1} parent=1 // pred_check_branch
      %86 = sbr.rel (0) target = $region45
    $region44: #{tpu_custom_call.1} parent=1 // pred_region
      _
    $region45: #{tpu_custom_call.1} parent=1 // pred_fallthru
      _
    // Predicated region
    $region46: #{tpu_custom_call.1} parent=1 // pred_check
      _
    $region47: #{tpu_custom_call.1} parent=1 // pred_check_branch
      %88 = sbr.rel (0) target = $region49
    $region48: #{tpu_custom_call.1} parent=1 // pred_region
      %s90 = ssub.s32 2048, 2048
      %91 = vsyncadd [#allocation9], %s90
      %s92 = sshll.u32 [#allocation8], 4
      %s93 = int_to_ptr.vmem [resolvable:$true] %s92
      %98 = dma.hbm_to_vmem [thread:$0]  %s11, 2048, %s93, [#allocation9], 64, 64, 4
    $region49: #{tpu_custom_call.1} parent=1 // pred_fallthru
      _
    // Predicated region
    $region50: #{tpu_custom_call.1} parent=1 // pred_check
      _
    $region51: #{tpu_custom_call.1} parent=1 // pred_check_branch
      %100 = sbr.rel (0) target = $region53
    $region52: #{tpu_custom_call.1} parent=1 // pred_region
      %s102 = ssub.s32 2048, 2048
      %103 = vsyncadd [#allocation9], %s102
      %s104 = sshll.u32 [#allocation10], 4
      %s105 = int_to_ptr.vmem [resolvable:$true] %s104
      %110 = dma.hbm_to_vmem [thread:$0]  %s12, 2048, %s105, [#allocation9], 64, 64, 4
    $region53: #{tpu_custom_call.1} parent=1 // pred_fallthru
      _
    // Predicated region
    $region54: #{tpu_custom_call.1} parent=1 // pred_check
      _
    $region55: #{tpu_custom_call.1} parent=1 // pred_check_branch
      %112 = sbr.rel (0) target = $region57
    $region56: #{tpu_custom_call.1} parent=1 // pred_region
      %s114 = ssub.s32 2048, 2048
      %115 = vsyncadd [#allocation12], %s114
      %s116 = sshll.u32 [#allocation11], 4
      %s117 = int_to_ptr.vmem [resolvable:$true] %s116
      %122 = dma.hbm_to_vmem [thread:$0]  %s13, 2048, %s117, [#allocation12], 64, 64, 4
    $region57: #{tpu_custom_call.1} parent=1 // pred_fallthru
      _
    // Predicated region
    $region58: #{tpu_custom_call.1} parent=1 // pred_check
      _
    $region59: #{tpu_custom_call.1} parent=1 // pred_check_branch
      %124 = sbr.rel (0) target = $region61
    $region60: #{tpu_custom_call.1} parent=1 // pred_region
      _
    $region61: #{tpu_custom_call.1} parent=1 // pred_fallthru
      _
    // Predicated region
    $region62: #{tpu_custom_call.1} parent=1 // pred_check
      _
    $region63: #{tpu_custom_call.1} parent=1 // pred_check_branch
      %126 = sbr.rel (0) target = $region65
    $region64: #{tpu_custom_call.1} parent=1 // pred_region
      _
    $region65: #{tpu_custom_call.1} parent=1 // pred_fallthru
      _
    // Predicated region
    $region66: #{tpu_custom_call.1} parent=1 // pred_check
      _
    $region67: #{tpu_custom_call.1} parent=1 // pred_check_branch
      %128 = sbr.rel (0) target = $region69
    $region68: #{tpu_custom_call.1} parent=1 // pred_region
      _
    $region69: #{tpu_custom_call.1} parent=1 // pred_fallthru
      _
    // Predicated region
    $region70: #{tpu_custom_call.1} parent=1 // pred_check
      _
    $region71: #{tpu_custom_call.1} parent=1 // pred_check_branch
      %130 = sbr.rel (0) target = $region73
    $region72: #{tpu_custom_call.1} parent=1 // pred_region
      %s132 = ssub.s32 2048, 2048
      %133 = vsyncadd [#allocation12], %s132
      %s134 = sshll.u32 [#allocation13], 4
      %s135 = int_to_ptr.vmem [resolvable:$true] %s134
      %140 = dma.hbm_to_vmem [thread:$0]  %s17, 2048, %s135, [#allocation12], 64, 64, 4
    $region73: #{tpu_custom_call.1} parent=1 // pred_fallthru
      _
    // Predicated region
    $region74: #{tpu_custom_call.1} parent=1 // pred_check
      _
    $region75: #{tpu_custom_call.1} parent=1 // pred_check_branch
      %142 = sbr.rel (0) target = $region77
    $region76: #{tpu_custom_call.1} parent=1 // pred_region
      _
    $region77: #{tpu_custom_call.1} parent=1 // pred_fallthru
      _
    // Predicated region
    $region78: #{tpu_custom_call.1} parent=1 // pred_check
      _
    $region79: #{tpu_custom_call.1} parent=1 // pred_check_branch
      %144 = sbr.rel (0) target = $region81
    $region80: #{tpu_custom_call.1} parent=1 // pred_region
      %s146 = ssub.s32 2048, 2048
      %147 = vsyncadd [#allocation15], %s146
      %s148 = sshll.u32 [#allocation14], 4
      %s149 = int_to_ptr.vmem [resolvable:$true] %s148
      %154 = dma.hbm_to_vmem [thread:$0]  %s19, 2048, %s149, [#allocation15], 64, 64, 4
    $region81: #{tpu_custom_call.1} parent=1 // pred_fallthru
      _
    // Predicated region
    $region82: #{tpu_custom_call.1} parent=1 // pred_check
      _
    $region83: #{tpu_custom_call.1} parent=1 // pred_check_branch
      %156 = sbr.rel (0) target = $region85
    $region84: #{tpu_custom_call.1} parent=1 // pred_region
      _
    $region85: #{tpu_custom_call.1} parent=1 // pred_fallthru
      _
    // Predicated region
    $region86: #{tpu_custom_call.1} parent=1 // pred_check
      _
    $region87: #{tpu_custom_call.1} parent=1 // pred_check_branch
      %158 = sbr.rel (0) target = $region89
    $region88: #{tpu_custom_call.1} parent=1 // pred_region
      %159 = dma.done [#allocation3], 2048
    $region89: #{tpu_custom_call.1} parent=1 // pred_fallthru
      _
    // Predicated region
    $region90: #{tpu_custom_call.1} parent=1 // pred_check
      _
    $region91: #{tpu_custom_call.1} parent=1 // pred_check_branch
      %161 = sbr.rel (0) target = $region93
    $region92: #{tpu_custom_call.1} parent=1 // pred_region
      %162 = dma.done [#allocation6], 2048
    $region93: #{tpu_custom_call.1} parent=1 // pred_fallthru
      _
    // Predicated region
    $region94: #{tpu_custom_call.1} parent=1 // pred_check
      _
    $region95: #{tpu_custom_call.1} parent=1 // pred_check_branch
      %164 = sbr.rel (0) target = $region97
    $region96: #{tpu_custom_call.1} parent=1 // pred_region
      %165 = dma.done [#allocation6], 2048
    $region97: #{tpu_custom_call.1} parent=1 // pred_fallthru
      _
    // Predicated region
    $region98: #{tpu_custom_call.1} parent=1 // pred_check
      _
    $region99: #{tpu_custom_call.1} parent=1 // pred_check_branch
      %167 = sbr.rel (0) target = $region101
    $region100: #{tpu_custom_call.1} parent=1 // pred_region
      %168 = dma.done [#allocation9], 2048
    $region101: #{tpu_custom_call.1} parent=1 // pred_fallthru
      _
    // Predicated region
    $region102: #{tpu_custom_call.1} parent=1 // pred_check
      _
    $region103: #{tpu_custom_call.1} parent=1 // pred_check_branch
      %170 = sbr.rel (0) target = $region105
    $region104: #{tpu_custom_call.1} parent=1 // pred_region
      %171 = dma.done [#allocation9], 2048
    $region105: #{tpu_custom_call.1} parent=1 // pred_fallthru
      _
    // Predicated region
    $region106: #{tpu_custom_call.1} parent=1 // pred_check
      _
    $region107: #{tpu_custom_call.1} parent=1 // pred_check_branch
      %173 = sbr.rel (0) target = $region109
    $region108: #{tpu_custom_call.1} parent=1 // pred_region
      %174 = dma.done [#allocation12], 2048
    $region109: #{tpu_custom_call.1} parent=1 // pred_fallthru
      _
    // Predicated region
    $region110: #{tpu_custom_call.1} parent=1 // pred_check
      _
    $region111: #{tpu_custom_call.1} parent=1 // pred_check_branch
      %176 = sbr.rel (0) target = $region113
    $region112: #{tpu_custom_call.1} parent=1 // pred_region
      %177 = dma.done [#allocation12], 2048
    $region113: #{tpu_custom_call.1} parent=1 // pred_fallthru
      _
    // Predicated region
    $region114: #{tpu_custom_call.1} parent=1 // pred_check
      _
    $region115: #{tpu_custom_call.1} parent=1 // pred_check_branch
      %179 = sbr.rel (0) target = $region117
    $region116: #{tpu_custom_call.1} parent=1 // pred_region
      %180 = dma.done [#allocation15], 2048
    $region117: #{tpu_custom_call.1} parent=1 // pred_fallthru
      _
    %v182 = vld [vmem:[%s0] sm:$0xff]
    %v183 = vpack.c.bf16 %v182, %v182
    %v184 = vld [vmem:[%s1] sm:$0xff]
    %v185 = vld [vmem:[%s1 + $0x8] sm:$0xff]
    %v186 = vld [vmem:[%s2] sm:$0xf]
    %v187 = vld [vmem:[%s2 + $0x4] sm:$0xf]
    %v188 = vld [vmem:[%s3] sm:$0xf]
    %v189 = vld [vmem:[%s3 + $0x4] sm:$0xf]
    %v190 = vld [vmem:[%s4] sm:$0xf]
    %v191 = vld [vmem:[%s5] sm:$0xf]
    %v192 = vld [vmem:[%s6] sm:$0xff]
    %v193 = vld [vmem:[#allocation2] sm:$0xf]
    %v194 = vld [vmem:[#allocation2 + $0x4] sm:$0xf]
    %v195 = vld [vmem:[#allocation2 + $0x8] sm:$0xf]
    %v196 = vld [vmem:[#allocation2 + $0xc] sm:$0xf]
    %v197 = vld [vmem:[#allocation2 + $0x10] sm:$0xf]
    %v198 = vld [vmem:[#allocation2 + $0x14] sm:$0xf]
    %v199 = vld [vmem:[#allocation2 + $0x18] sm:$0xf]
    %v200 = vld [vmem:[#allocation2 + $0x1c] sm:$0xf]
    %v201 = vld [vmem:[#allocation2 + $0x20] sm:$0xf]
    %v202 = vld [vmem:[#allocation2 + $0x24] sm:$0xf]
    %v203 = vld [vmem:[#allocation2 + $0x28] sm:$0xf]
    %v204 = vld [vmem:[#allocation2 + $0x2c] sm:$0xf]
    %v205 = vld [vmem:[#allocation2 + $0x30] sm:$0xf]
    %v206 = vld [vmem:[#allocation2 + $0x34] sm:$0xf]
    %v207 = vld [vmem:[#allocation2 + $0x38] sm:$0xf]
    %v208 = vld [vmem:[#allocation2 + $0x3c] sm:$0xf]
    %v225 = vunpack.c.l.b16 %v193
    %v226 = vunpack.c.l.b16 %v194
    %v227 = vunpack.c.l.b16 %v195
    %v228 = vunpack.c.l.b16 %v196
    %v229 = vunpack.c.l.b16 %v197
    %v230 = vunpack.c.l.b16 %v198
    %v231 = vunpack.c.l.b16 %v199
    %v232 = vunpack.c.l.b16 %v200
    %v233 = vunpack.c.l.b16 %v201
    %v234 = vunpack.c.l.b16 %v202
    %v235 = vunpack.c.l.b16 %v203
    %v236 = vunpack.c.l.b16 %v204
    %v237 = vunpack.c.l.b16 %v205
    %v238 = vunpack.c.l.b16 %v206
    %v239 = vunpack.c.l.b16 %v207
    %v240 = vunpack.c.l.b16 %v208
    %v241 = vpack.c.b16 %v226, %v225
    %v242 = vpack.c.b16 %v228, %v227
    %v243 = vpack.c.b16 %v230, %v229
    %v244 = vpack.c.b16 %v232, %v231
    %v245 = vpack.c.b16 %v234, %v233
    %v246 = vpack.c.b16 %v236, %v235
    %v247 = vpack.c.b16 %v238, %v237
    %v248 = vpack.c.b16 %v240, %v239
    %257 = vmatprep.subr.bf16.mxu0 0
    %258 = vmatpush1.bf16.msra.mxu0 %v248
    %259 = vmatprep.subr.bf16.mxu0 0
    %260 = vmatpush1.bf16.msra.mxu0 %v247
    %261 = vmatprep.subr.bf16.mxu0 0
    %262 = vmatpush1.bf16.msra.mxu0 %v246
    %263 = vmatprep.subr.bf16.mxu0 0
    %264 = vmatpush1.bf16.msra.mxu0 %v245
    %265 = vmatprep.subr.bf16.mxu0 0
    %266 = vmatpush1.bf16.msra.mxu0 %v244
    %267 = vmatprep.subr.bf16.mxu0 0
    %268 = vmatpush1.bf16.msra.mxu0 %v243
    %269 = vmatprep.subr.bf16.mxu0 0
    %270 = vmatpush1.bf16.msra.mxu0 %v242
    %271 = vmatprep.subr.bf16.mxu0 0
    %272 = vmatpush1.bf16.msra.mxu0 %v241
    %273 = vmatprep.subr.bf16.mxu0 0
    %274 = vmatpush2.bf16.msra.mxu0 0
    %275 = vmatprep.subr.bf16.mxu0 0
    %276 = vmatpush2.bf16.msra.mxu0 0
    %277 = vmatprep.subr.bf16.mxu0 0
    %278 = vmatpush2.bf16.msra.mxu0 0
    %279 = vmatprep.subr.bf16.mxu0 0
    %280 = vmatpush2.bf16.msra.mxu0 0
    %281 = vmatprep.subr.bf16.mxu0 0
    %282 = vmatpush2.bf16.msra.mxu0 0
    %283 = vmatprep.subr.bf16.mxu0 0
    %284 = vmatpush2.bf16.msra.mxu0 0
    %285 = vmatprep.subr.bf16.mxu0 0
    %286 = vmatpush2.bf16.msra.mxu0 0
    %287 = vmatprep.subr.bf16.mxu0 0
    %288 = vmatpush2.bf16.msra.mxu0 0
    %289 = vmatprep.mubr.bf16.mxu0 0
    %290 = vmatmul.mubr.bf16.gmra.mxu0 %v183
    %v291 = vpop.f32.mrf.mxu0
    %v292 = vadd.f32 0.0, %v291
    %v293 = vpop.f32.mrf.mxu0
    %v294 = vpop.f32.mrf.mxu0
    %v295 = vpop.f32.mrf.mxu0
    %296 = vdwg.mxu0
    %v297 = vld [vmem:[#allocation7] sm:$0xf]
    %v298 = vld [vmem:[#allocation7 + $0x4] sm:$0xf]
    %v299 = vld [vmem:[#allocation7 + $0x8] sm:$0xf]
    %v300 = vld [vmem:[#allocation7 + $0xc] sm:$0xf]
    %v301 = vld [vmem:[#allocation7 + $0x10] sm:$0xf]
    %v302 = vld [vmem:[#allocation7 + $0x14] sm:$0xf]
    %v303 = vld [vmem:[#allocation7 + $0x18] sm:$0xf]
    %v304 = vld [vmem:[#allocation7 + $0x1c] sm:$0xf]
    %v305 = vld [vmem:[#allocation7 + $0x20] sm:$0xf]
    %v306 = vld [vmem:[#allocation7 + $0x24] sm:$0xf]
    %v307 = vld [vmem:[#allocation7 + $0x28] sm:$0xf]
    %v308 = vld [vmem:[#allocation7 + $0x2c] sm:$0xf]
    %v309 = vld [vmem:[#allocation7 + $0x30] sm:$0xf]
    %v310 = vld [vmem:[#allocation7 + $0x34] sm:$0xf]
    %v311 = vld [vmem:[#allocation7 + $0x38] sm:$0xf]
    %v312 = vld [vmem:[#allocation7 + $0x3c] sm:$0xf]
    %v329 = vunpack.c.l.b16 %v297
    %v330 = vunpack.c.l.b16 %v298
    %v331 = vunpack.c.l.b16 %v299
    %v332 = vunpack.c.l.b16 %v300
    %v333 = vunpack.c.l.b16 %v301
    %v334 = vunpack.c.l.b16 %v302
    %v335 = vunpack.c.l.b16 %v303
    %v336 = vunpack.c.l.b16 %v304
    %v337 = vunpack.c.l.b16 %v305
    %v338 = vunpack.c.l.b16 %v306
    %v339 = vunpack.c.l.b16 %v307
    %v340 = vunpack.c.l.b16 %v308
    %v341 = vunpack.c.l.b16 %v309
    %v342 = vunpack.c.l.b16 %v310
    %v343 = vunpack.c.l.b16 %v311
    %v344 = vunpack.c.l.b16 %v312
    %v345 = vpack.c.b16 %v330, %v329
    %v346 = vpack.c.b16 %v332, %v331
    %v347 = vpack.c.b16 %v334, %v333
    %v348 = vpack.c.b16 %v336, %v335
    %v349 = vpack.c.b16 %v338, %v337
    %v350 = vpack.c.b16 %v340, %v339
    %v351 = vpack.c.b16 %v342, %v341
    %v352 = vpack.c.b16 %v344, %v343
    %361 = vmatprep.subr.bf16.mxu0 0
    %362 = vmatpush1.bf16.msra.mxu0 %v352
    %363 = vmatprep.subr.bf16.mxu0 0
    %364 = vmatpush1.bf16.msra.mxu0 %v351
    %365 = vmatprep.subr.bf16.mxu0 0
    %366 = vmatpush1.bf16.msra.mxu0 %v350
    %367 = vmatprep.subr.bf16.mxu0 0
    %368 = vmatpush1.bf16.msra.mxu0 %v349
    %369 = vmatprep.subr.bf16.mxu0 0
    %370 = vmatpush1.bf16.msra.mxu0 %v348
    %371 = vmatprep.subr.bf16.mxu0 0
    %372 = vmatpush1.bf16.msra.mxu0 %v347
    %373 = vmatprep.subr.bf16.mxu0 0
    %374 = vmatpush1.bf16.msra.mxu0 %v346
    %375 = vmatprep.subr.bf16.mxu0 0
    %376 = vmatpush1.bf16.msra.mxu0 %v345
    %377 = vmatprep.subr.bf16.mxu0 0
    %378 = vmatpush2.bf16.msra.mxu0 0
    %379 = vmatprep.subr.bf16.mxu0 0
    %380 = vmatpush2.bf16.msra.mxu0 0
    %381 = vmatprep.subr.bf16.mxu0 0
    %382 = vmatpush2.bf16.msra.mxu0 0
    %383 = vmatprep.subr.bf16.mxu0 0
    %384 = vmatpush2.bf16.msra.mxu0 0
    %385 = vmatprep.subr.bf16.mxu0 0
    %386 = vmatpush2.bf16.msra.mxu0 0
    %387 = vmatprep.subr.bf16.mxu0 0
    %388 = vmatpush2.bf16.msra.mxu0 0
    %389 = vmatprep.subr.bf16.mxu0 0
    %390 = vmatpush2.bf16.msra.mxu0 0
    %391 = vmatprep.subr.bf16.mxu0 0
    %392 = vmatpush2.bf16.msra.mxu0 0
    %393 = vmatprep.mubr.bf16.mxu0 0
    %394 = vmatmul.mubr.bf16.gmra.mxu0 %v183
    %v395 = vpop.f32.mrf.mxu0
    %v396 = vadd.f32 0.0, %v395
    %v397 = vpop.f32.mrf.mxu0
    %v398 = vpop.f32.mrf.mxu0
    %v399 = vpop.f32.mrf.mxu0
    %400 = vdwg.mxu0
    %v401 = vpack.c.bf16 %v292, %v292
    %v402 = vpack.c.bf16 %v185, %v184
    %v403 = vld [vmem:[#allocation5] sm:$0xf]
    %v404 = vld [vmem:[#allocation5 + $0x4] sm:$0xf]
    %v405 = vld [vmem:[#allocation5 + $0x8] sm:$0xf]
    %v406 = vld [vmem:[#allocation5 + $0xc] sm:$0xf]
    %v407 = vld [vmem:[#allocation5 + $0x10] sm:$0xf]
    %v408 = vld [vmem:[#allocation5 + $0x14] sm:$0xf]
    %v409 = vld [vmem:[#allocation5 + $0x18] sm:$0xf]
    %v410 = vld [vmem:[#allocation5 + $0x1c] sm:$0xf]
    %v411 = vld [vmem:[#allocation5 + $0x20] sm:$0xf]
    %v412 = vld [vmem:[#allocation5 + $0x24] sm:$0xf]
    %v413 = vld [vmem:[#allocation5 + $0x28] sm:$0xf]
    %v414 = vld [vmem:[#allocation5 + $0x2c] sm:$0xf]
    %v415 = vld [vmem:[#allocation5 + $0x30] sm:$0xf]
    %v416 = vld [vmem:[#allocation5 + $0x34] sm:$0xf]
    %v417 = vld [vmem:[#allocation5 + $0x38] sm:$0xf]
    %v418 = vld [vmem:[#allocation5 + $0x3c] sm:$0xf]
    %v435 = vunpack.c.l.b16 %v403
    %v436 = vunpack.c.l.b16 %v404
    %v437 = vunpack.c.l.b16 %v405
    %v438 = vunpack.c.l.b16 %v406
    %v439 = vunpack.c.l.b16 %v407
    %v440 = vunpack.c.l.b16 %v408
    %v441 = vunpack.c.l.b16 %v409
    %v442 = vunpack.c.l.b16 %v410
    %v443 = vunpack.c.l.b16 %v411
    %v444 = vunpack.c.l.b16 %v412
    %v445 = vunpack.c.l.b16 %v413
    %v446 = vunpack.c.l.b16 %v414
    %v447 = vunpack.c.l.b16 %v415
    %v448 = vunpack.c.l.b16 %v416
    %v449 = vunpack.c.l.b16 %v417
    %v450 = vunpack.c.l.b16 %v418
    %v451 = vpack.c.b16 %v436, %v435
    %v452 = vpack.c.b16 %v438, %v437
    %v453 = vpack.c.b16 %v440, %v439
    %v454 = vpack.c.b16 %v442, %v441
    %v455 = vpack.c.b16 %v444, %v443
    %v456 = vpack.c.b16 %v446, %v445
    %v457 = vpack.c.b16 %v448, %v447
    %v458 = vpack.c.b16 %v450, %v449
    %467 = vmatprep.subr.bf16.mxu0 0
    %468 = vmatpush1.bf16.msra.mxu0 %v458
    %469 = vmatprep.subr.bf16.mxu0 0
    %470 = vmatpush1.bf16.msra.mxu0 %v457
    %471 = vmatprep.subr.bf16.mxu0 0
    %472 = vmatpush1.bf16.msra.mxu0 %v456
    %473 = vmatprep.subr.bf16.mxu0 0
    %474 = vmatpush1.bf16.msra.mxu0 %v455
    %475 = vmatprep.subr.bf16.mxu0 0
    %476 = vmatpush1.bf16.msra.mxu0 %v454
    %477 = vmatprep.subr.bf16.mxu0 0
    %478 = vmatpush1.bf16.msra.mxu0 %v453
    %479 = vmatprep.subr.bf16.mxu0 0
    %480 = vmatpush1.bf16.msra.mxu0 %v452
    %481 = vmatprep.subr.bf16.mxu0 0
    %482 = vmatpush1.bf16.msra.mxu0 %v451
    %483 = vmatprep.subr.bf16.mxu0 0
    %484 = vmatpush2.bf16.msra.mxu0 0
    %485 = vmatprep.subr.bf16.mxu0 0
    %486 = vmatpush2.bf16.msra.mxu0 0
    %487 = vmatprep.subr.bf16.mxu0 0
    %488 = vmatpush2.bf16.msra.mxu0 0
    %489 = vmatprep.subr.bf16.mxu0 0
    %490 = vmatpush2.bf16.msra.mxu0 0
    %491 = vmatprep.subr.bf16.mxu0 0
    %492 = vmatpush2.bf16.msra.mxu0 0
    %493 = vmatprep.subr.bf16.mxu0 0
    %494 = vmatpush2.bf16.msra.mxu0 0
    %495 = vmatprep.subr.bf16.mxu0 0
    %496 = vmatpush2.bf16.msra.mxu0 0
    %497 = vmatprep.subr.bf16.mxu0 0
    %498 = vmatpush2.bf16.msra.mxu0 0
    %499 = vmatprep.mubr.bf16.mxu0 0
    %500 = vmatmul.mubr.bf16.gmra.mxu0 %v402
    %v501 = vpop.f32.mrf.mxu0
    %v502 = vadd.f32 0.0, %v501
    %v503 = vpop.f32.mrf.mxu0
    %v504 = vpop.f32.mrf.mxu0
    %v505 = vadd.f32 0.0, %v504
    %v506 = vpop.f32.mrf.mxu0
    %507 = vdwg.mxu0
    %v510 = vunpack.c.l.b16 %v186
    %v511 = vunpack.c.l.b16 %v187
    %v512 = vpack.c.b16 %v511, %v510
    %vm513 = vcmask 64512
    %v515 = vsel %vm513, %v512, 0
    %vm517 = vcmask 1043456
    %v519 = vsel %vm517, %v401, 0
    %521 = vmatprep.subr.bf16.mxu0 0
    %522 = vmatpush1.bf16.msra.mxu0 0
    %523 = vmatprep.subr.bf16.mxu0 0
    %524 = vmatpush1.bf16.msra.mxu0 0
    %525 = vmatprep.subr.bf16.mxu0 0
    %526 = vmatpush1.bf16.msra.mxu0 0
    %527 = vmatprep.subr.bf16.mxu0 0
    %528 = vmatpush1.bf16.msra.mxu0 0
    %529 = vmatprep.subr.bf16.mxu0 0
    %530 = vmatpush1.bf16.msra.mxu0 0
    %531 = vmatprep.subr.bf16.mxu0 0
    %532 = vmatpush1.bf16.msra.mxu0 0
    %533 = vmatprep.subr.bf16.mxu0 0
    %534 = vmatpush1.bf16.msra.mxu0 0
    %535 = vmatprep.subr.bf16.mxu0 0
    %536 = vmatpush1.bf16.msra.mxu0 %v519
    %537 = vmatprep.subr.bf16.mxu0 0
    %538 = vmatpush2.bf16.msra.mxu0 0
    %539 = vmatprep.subr.bf16.mxu0 0
    %540 = vmatpush2.bf16.msra.mxu0 0
    %541 = vmatprep.subr.bf16.mxu0 0
    %542 = vmatpush2.bf16.msra.mxu0 0
    %543 = vmatprep.subr.bf16.mxu0 0
    %544 = vmatpush2.bf16.msra.mxu0 0
    %545 = vmatprep.subr.bf16.mxu0 0
    %546 = vmatpush2.bf16.msra.mxu0 0
    %547 = vmatprep.subr.bf16.mxu0 0
    %548 = vmatpush2.bf16.msra.mxu0 0
    %549 = vmatprep.subr.bf16.mxu0 0
    %550 = vmatpush2.bf16.msra.mxu0 0
    %551 = vmatprep.subr.bf16.mxu0 0
    %552 = vmatpush2.bf16.msra.mxu0 0
    %553 = vmatprep.mubr.bf16.mxu0 0
    %554 = vmatmul.mubr.bf16.gmra.mxu0 %v515
    %v555 = vpop.f32.mrf.mxu0
    %v556 = vadd.f32 %v502, %v555
    %v557 = vpop.f32.mrf.mxu0
    %v558 = vpop.f32.mrf.mxu0
    %v559 = vadd.f32 %v505, %v558
    %v560 = vpop.f32.mrf.mxu0
    %561 = vdwg.mxu0
    %v562 = vpack.c.bf16 %v396, %v396
    %v565 = vunpack.c.l.b16 %v188
    %v566 = vunpack.c.l.b16 %v189
    %v567 = vpack.c.b16 %v566, %v565
    %v569 = vsel %vm513, %v567, 0
    %v572 = vsel %vm517, %v562, 0
    %574 = vmatprep.subr.bf16.mxu0 0
    %575 = vmatpush1.bf16.msra.mxu0 0
    %576 = vmatprep.subr.bf16.mxu0 0
    %577 = vmatpush1.bf16.msra.mxu0 0
    %578 = vmatprep.subr.bf16.mxu0 0
    %579 = vmatpush1.bf16.msra.mxu0 0
    %580 = vmatprep.subr.bf16.mxu0 0
    %581 = vmatpush1.bf16.msra.mxu0 0
    %582 = vmatprep.subr.bf16.mxu0 0
    %583 = vmatpush1.bf16.msra.mxu0 0
    %584 = vmatprep.subr.bf16.mxu0 0
    %585 = vmatpush1.bf16.msra.mxu0 0
    %586 = vmatprep.subr.bf16.mxu0 0
    %587 = vmatpush1.bf16.msra.mxu0 0
    %588 = vmatprep.subr.bf16.mxu0 0
    %589 = vmatpush1.bf16.msra.mxu0 %v572
    %590 = vmatprep.subr.bf16.mxu0 0
    %591 = vmatpush2.bf16.msra.mxu0 0
    %592 = vmatprep.subr.bf16.mxu0 0
    %593 = vmatpush2.bf16.msra.mxu0 0
    %594 = vmatprep.subr.bf16.mxu0 0
    %595 = vmatpush2.bf16.msra.mxu0 0
    %596 = vmatprep.subr.bf16.mxu0 0
    %597 = vmatpush2.bf16.msra.mxu0 0
    %598 = vmatprep.subr.bf16.mxu0 0
    %599 = vmatpush2.bf16.msra.mxu0 0
    %600 = vmatprep.subr.bf16.mxu0 0
    %601 = vmatpush2.bf16.msra.mxu0 0
    %602 = vmatprep.subr.bf16.mxu0 0
    %603 = vmatpush2.bf16.msra.mxu0 0
    %604 = vmatprep.subr.bf16.mxu0 0
    %605 = vmatpush2.bf16.msra.mxu0 0
    %606 = vmatprep.mubr.bf16.mxu0 0
    %607 = vmatmul.mubr.bf16.gmra.mxu0 %v569
    %v608 = vpop.f32.mrf.mxu0
    %v609 = vadd.f32 0.0, %v608
    %v610 = vpop.f32.mrf.mxu0
    %v611 = vpop.f32.mrf.mxu0
    %v612 = vadd.f32 0.0, %v611
    %v613 = vpop.f32.mrf.mxu0
    %614 = vdwg.mxu0
    %v615 = vadd.f32 %v556, %v609
    %v616 = vadd.f32 %v559, %v612
    %v617 = vld [vmem:[%s10] sm:$0x1]
    %v619 = vlaneseq
    %v620 = vshrl.u32 %v619, 7
    %v621 = vsub.s32 0, %v620
    %v622 = vrot.slane %v617, %v621
    %v624 = vadd.f32 %v615, %v622
    %v625 = vadd.f32 %v616, %v622
    %v626 = vmax.f32 %v624, 0.0
    %v627 = vmax.f32 %v625, 0.0
    %v628 = vpack.c.bf16 %v627, %v626
    %v629 = vld [vmem:[#allocation8] sm:$0xf]
    %v630 = vld [vmem:[#allocation8 + $0x4] sm:$0xf]
    %v631 = vld [vmem:[#allocation8 + $0x8] sm:$0xf]
    %v632 = vld [vmem:[#allocation8 + $0xc] sm:$0xf]
    %v633 = vld [vmem:[#allocation8 + $0x10] sm:$0xf]
    %v634 = vld [vmem:[#allocation8 + $0x14] sm:$0xf]
    %v635 = vld [vmem:[#allocation8 + $0x18] sm:$0xf]
    %v636 = vld [vmem:[#allocation8 + $0x1c] sm:$0xf]
    %v637 = vld [vmem:[#allocation8 + $0x20] sm:$0xf]
    %v638 = vld [vmem:[#allocation8 + $0x24] sm:$0xf]
    %v639 = vld [vmem:[#allocation8 + $0x28] sm:$0xf]
    %v640 = vld [vmem:[#allocation8 + $0x2c] sm:$0xf]
    %v641 = vld [vmem:[#allocation8 + $0x30] sm:$0xf]
    %v642 = vld [vmem:[#allocation8 + $0x34] sm:$0xf]
    %v643 = vld [vmem:[#allocation8 + $0x38] sm:$0xf]
    %v644 = vld [vmem:[#allocation8 + $0x3c] sm:$0xf]
    %v645 = vld [vmem:[%s14] sm:$0x1]
    %v647 = vlaneseq
    %v648 = vshrl.u32 %v647, 7
    %v649 = vsub.s32 0, %v648
    %v650 = vrot.slane %v645, %v649
    %v668 = vunpack.c.l.b16 %v629
    %v669 = vunpack.c.l.b16 %v630
    %v670 = vunpack.c.l.b16 %v631
    %v671 = vunpack.c.l.b16 %v632
    %v672 = vunpack.c.l.b16 %v633
    %v673 = vunpack.c.l.b16 %v634
    %v674 = vunpack.c.l.b16 %v635
    %v675 = vunpack.c.l.b16 %v636
    %v676 = vunpack.c.l.b16 %v637
    %v677 = vunpack.c.l.b16 %v638
    %v678 = vunpack.c.l.b16 %v639
    %v679 = vunpack.c.l.b16 %v640
    %v680 = vunpack.c.l.b16 %v641
    %v681 = vunpack.c.l.b16 %v642
    %v682 = vunpack.c.l.b16 %v643
    %v683 = vunpack.c.l.b16 %v644
    %v684 = vpack.c.b16 %v669, %v668
    %v685 = vpack.c.b16 %v671, %v670
    %v686 = vpack.c.b16 %v673, %v672
    %v687 = vpack.c.b16 %v675, %v674
    %v688 = vpack.c.b16 %v677, %v676
    %v689 = vpack.c.b16 %v679, %v678
    %v690 = vpack.c.b16 %v681, %v680
    %v691 = vpack.c.b16 %v683, %v682
    %700 = vmatprep.subr.bf16.mxu0 0
    %701 = vmatpush1.bf16.msra.mxu0 %v691
    %702 = vmatprep.subr.bf16.mxu0 0
    %703 = vmatpush1.bf16.msra.mxu0 %v690
    %704 = vmatprep.subr.bf16.mxu0 0
    %705 = vmatpush1.bf16.msra.mxu0 %v689
    %706 = vmatprep.subr.bf16.mxu0 0
    %707 = vmatpush1.bf16.msra.mxu0 %v688
    %708 = vmatprep.subr.bf16.mxu0 0
    %709 = vmatpush1.bf16.msra.mxu0 %v687
    %710 = vmatprep.subr.bf16.mxu0 0
    %711 = vmatpush1.bf16.msra.mxu0 %v686
    %712 = vmatprep.subr.bf16.mxu0 0
    %713 = vmatpush1.bf16.msra.mxu0 %v685
    %714 = vmatprep.subr.bf16.mxu0 0
    %715 = vmatpush1.bf16.msra.mxu0 %v684
    %716 = vmatprep.subr.bf16.mxu0 0
    %717 = vmatpush2.bf16.msra.mxu0 0
    %718 = vmatprep.subr.bf16.mxu0 0
    %719 = vmatpush2.bf16.msra.mxu0 0
    %720 = vmatprep.subr.bf16.mxu0 0
    %721 = vmatpush2.bf16.msra.mxu0 0
    %722 = vmatprep.subr.bf16.mxu0 0
    %723 = vmatpush2.bf16.msra.mxu0 0
    %724 = vmatprep.subr.bf16.mxu0 0
    %725 = vmatpush2.bf16.msra.mxu0 0
    %726 = vmatprep.subr.bf16.mxu0 0
    %727 = vmatpush2.bf16.msra.mxu0 0
    %728 = vmatprep.subr.bf16.mxu0 0
    %729 = vmatpush2.bf16.msra.mxu0 0
    %730 = vmatprep.subr.bf16.mxu0 0
    %731 = vmatpush2.bf16.msra.mxu0 0
    %732 = vmatprep.mubr.bf16.mxu0 0
    %733 = vmatmul.mubr.bf16.gmra.mxu0 %v628
    %v734 = vpop.f32.mrf.mxu0
    %v735 = vadd.f32 %v650, %v734
    %v736 = vpop.f32.mrf.mxu0
    %v737 = vpop.f32.mrf.mxu0
    %v738 = vadd.f32 %v650, %v737
    %v739 = vpop.f32.mrf.mxu0
    %740 = vdwg.mxu0
    %v741 = vmax.f32 %v735, 0.0
    %v742 = vmax.f32 %v738, 0.0
    %v743 = vld [vmem:[#allocation10] sm:$0xf]
    %v744 = vld [vmem:[#allocation10 + $0x4] sm:$0xf]
    %v745 = vld [vmem:[#allocation10 + $0x8] sm:$0xf]
    %v746 = vld [vmem:[#allocation10 + $0xc] sm:$0xf]
    %v747 = vld [vmem:[#allocation10 + $0x10] sm:$0xf]
    %v748 = vld [vmem:[#allocation10 + $0x14] sm:$0xf]
    %v749 = vld [vmem:[#allocation10 + $0x18] sm:$0xf]
    %v750 = vld [vmem:[#allocation10 + $0x1c] sm:$0xf]
    %v751 = vld [vmem:[#allocation10 + $0x20] sm:$0xf]
    %v752 = vld [vmem:[#allocation10 + $0x24] sm:$0xf]
    %v753 = vld [vmem:[#allocation10 + $0x28] sm:$0xf]
    %v754 = vld [vmem:[#allocation10 + $0x2c] sm:$0xf]
    %v755 = vld [vmem:[#allocation10 + $0x30] sm:$0xf]
    %v756 = vld [vmem:[#allocation10 + $0x34] sm:$0xf]
    %v757 = vld [vmem:[#allocation10 + $0x38] sm:$0xf]
    %v758 = vld [vmem:[#allocation10 + $0x3c] sm:$0xf]
    %v759 = vld [vmem:[%s15] sm:$0x1]
    %v761 = vlaneseq
    %v762 = vshrl.u32 %v761, 7
    %v763 = vsub.s32 0, %v762
    %v764 = vrot.slane %v759, %v763
    %v782 = vunpack.c.l.b16 %v743
    %v783 = vunpack.c.l.b16 %v744
    %v784 = vunpack.c.l.b16 %v745
    %v785 = vunpack.c.l.b16 %v746
    %v786 = vunpack.c.l.b16 %v747
    %v787 = vunpack.c.l.b16 %v748
    %v788 = vunpack.c.l.b16 %v749
    %v789 = vunpack.c.l.b16 %v750
    %v790 = vunpack.c.l.b16 %v751
    %v791 = vunpack.c.l.b16 %v752
    %v792 = vunpack.c.l.b16 %v753
    %v793 = vunpack.c.l.b16 %v754
    %v794 = vunpack.c.l.b16 %v755
    %v795 = vunpack.c.l.b16 %v756
    %v796 = vunpack.c.l.b16 %v757
    %v797 = vunpack.c.l.b16 %v758
    %v798 = vpack.c.b16 %v783, %v782
    %v799 = vpack.c.b16 %v785, %v784
    %v800 = vpack.c.b16 %v787, %v786
    %v801 = vpack.c.b16 %v789, %v788
    %v802 = vpack.c.b16 %v791, %v790
    %v803 = vpack.c.b16 %v793, %v792
    %v804 = vpack.c.b16 %v795, %v794
    %v805 = vpack.c.b16 %v797, %v796
    %814 = vmatprep.subr.bf16.mxu0 0
    %815 = vmatpush1.bf16.msra.mxu0 %v805
    %816 = vmatprep.subr.bf16.mxu0 0
    %817 = vmatpush1.bf16.msra.mxu0 %v804
    %818 = vmatprep.subr.bf16.mxu0 0
    %819 = vmatpush1.bf16.msra.mxu0 %v803
    %820 = vmatprep.subr.bf16.mxu0 0
    %821 = vmatpush1.bf16.msra.mxu0 %v802
    %822 = vmatprep.subr.bf16.mxu0 0
    %823 = vmatpush1.bf16.msra.mxu0 %v801
    %824 = vmatprep.subr.bf16.mxu0 0
    %825 = vmatpush1.bf16.msra.mxu0 %v800
    %826 = vmatprep.subr.bf16.mxu0 0
    %827 = vmatpush1.bf16.msra.mxu0 %v799
    %828 = vmatprep.subr.bf16.mxu0 0
    %829 = vmatpush1.bf16.msra.mxu0 %v798
    %830 = vmatprep.subr.bf16.mxu0 0
    %831 = vmatpush2.bf16.msra.mxu0 0
    %832 = vmatprep.subr.bf16.mxu0 0
    %833 = vmatpush2.bf16.msra.mxu0 0
    %834 = vmatprep.subr.bf16.mxu0 0
    %835 = vmatpush2.bf16.msra.mxu0 0
    %836 = vmatprep.subr.bf16.mxu0 0
    %837 = vmatpush2.bf16.msra.mxu0 0
    %838 = vmatprep.subr.bf16.mxu0 0
    %839 = vmatpush2.bf16.msra.mxu0 0
    %840 = vmatprep.subr.bf16.mxu0 0
    %841 = vmatpush2.bf16.msra.mxu0 0
    %842 = vmatprep.subr.bf16.mxu0 0
    %843 = vmatpush2.bf16.msra.mxu0 0
    %844 = vmatprep.subr.bf16.mxu0 0
    %845 = vmatpush2.bf16.msra.mxu0 0
    %846 = vmatprep.mubr.bf16.mxu0 0
    %847 = vmatmul.mubr.bf16.gmra.mxu0 %v628
    %v848 = vpop.f32.mrf.mxu0
    %v849 = vadd.f32 %v764, %v848
    %v850 = vpop.f32.mrf.mxu0
    %v851 = vpop.f32.mrf.mxu0
    %v852 = vadd.f32 %v764, %v851
    %v853 = vpop.f32.mrf.mxu0
    %854 = vdwg.mxu0
    %v855 = vmax.f32 %v849, 0.0
    %v856 = vmax.f32 %v852, 0.0
    %v857 = vld [vmem:[#allocation11] sm:$0xf]
    %v858 = vld [vmem:[#allocation11 + $0x4] sm:$0xf]
    %v859 = vld [vmem:[#allocation11 + $0x8] sm:$0xf]
    %v860 = vld [vmem:[#allocation11 + $0xc] sm:$0xf]
    %v861 = vld [vmem:[#allocation11 + $0x10] sm:$0xf]
    %v862 = vld [vmem:[#allocation11 + $0x14] sm:$0xf]
    %v863 = vld [vmem:[#allocation11 + $0x18] sm:$0xf]
    %v864 = vld [vmem:[#allocation11 + $0x1c] sm:$0xf]
    %v865 = vld [vmem:[#allocation11 + $0x20] sm:$0xf]
    %v866 = vld [vmem:[#allocation11 + $0x24] sm:$0xf]
    %v867 = vld [vmem:[#allocation11 + $0x28] sm:$0xf]
    %v868 = vld [vmem:[#allocation11 + $0x2c] sm:$0xf]
    %v869 = vld [vmem:[#allocation11 + $0x30] sm:$0xf]
    %v870 = vld [vmem:[#allocation11 + $0x34] sm:$0xf]
    %v871 = vld [vmem:[#allocation11 + $0x38] sm:$0xf]
    %v872 = vld [vmem:[#allocation11 + $0x3c] sm:$0xf]
    %v873 = vld [vmem:[%s16] sm:$0x1]
    %v875 = vlaneseq
    %v876 = vshrl.u32 %v875, 7
    %v877 = vsub.s32 0, %v876
    %v878 = vrot.slane %v873, %v877
    %v896 = vunpack.c.l.b16 %v857
    %v897 = vunpack.c.l.b16 %v858
    %v898 = vunpack.c.l.b16 %v859
    %v899 = vunpack.c.l.b16 %v860
    %v900 = vunpack.c.l.b16 %v861
    %v901 = vunpack.c.l.b16 %v862
    %v902 = vunpack.c.l.b16 %v863
    %v903 = vunpack.c.l.b16 %v864
    %v904 = vunpack.c.l.b16 %v865
    %v905 = vunpack.c.l.b16 %v866
    %v906 = vunpack.c.l.b16 %v867
    %v907 = vunpack.c.l.b16 %v868
    %v908 = vunpack.c.l.b16 %v869
    %v909 = vunpack.c.l.b16 %v870
    %v910 = vunpack.c.l.b16 %v871
    %v911 = vunpack.c.l.b16 %v872
    %v912 = vpack.c.b16 %v897, %v896
    %v913 = vpack.c.b16 %v899, %v898
    %v914 = vpack.c.b16 %v901, %v900
    %v915 = vpack.c.b16 %v903, %v902
    %v916 = vpack.c.b16 %v905, %v904
    %v917 = vpack.c.b16 %v907, %v906
    %v918 = vpack.c.b16 %v909, %v908
    %v919 = vpack.c.b16 %v911, %v910
    %928 = vmatprep.subr.bf16.mxu0 0
    %929 = vmatpush1.bf16.msra.mxu0 %v919
    %930 = vmatprep.subr.bf16.mxu0 0
    %931 = vmatpush1.bf16.msra.mxu0 %v918
    %932 = vmatprep.subr.bf16.mxu0 0
    %933 = vmatpush1.bf16.msra.mxu0 %v917
    %934 = vmatprep.subr.bf16.mxu0 0
    %935 = vmatpush1.bf16.msra.mxu0 %v916
    %936 = vmatprep.subr.bf16.mxu0 0
    %937 = vmatpush1.bf16.msra.mxu0 %v915
    %938 = vmatprep.subr.bf16.mxu0 0
    %939 = vmatpush1.bf16.msra.mxu0 %v914
    %940 = vmatprep.subr.bf16.mxu0 0
    %941 = vmatpush1.bf16.msra.mxu0 %v913
    %942 = vmatprep.subr.bf16.mxu0 0
    %943 = vmatpush1.bf16.msra.mxu0 %v912
    %944 = vmatprep.subr.bf16.mxu0 0
    %945 = vmatpush2.bf16.msra.mxu0 0
    %946 = vmatprep.subr.bf16.mxu0 0
    %947 = vmatpush2.bf16.msra.mxu0 0
    %948 = vmatprep.subr.bf16.mxu0 0
    %949 = vmatpush2.bf16.msra.mxu0 0
    %950 = vmatprep.subr.bf16.mxu0 0
    %951 = vmatpush2.bf16.msra.mxu0 0
    %952 = vmatprep.subr.bf16.mxu0 0
    %953 = vmatpush2.bf16.msra.mxu0 0
    %954 = vmatprep.subr.bf16.mxu0 0
    %955 = vmatpush2.bf16.msra.mxu0 0
    %956 = vmatprep.subr.bf16.mxu0 0
    %957 = vmatpush2.bf16.msra.mxu0 0
    %958 = vmatprep.subr.bf16.mxu0 0
    %959 = vmatpush2.bf16.msra.mxu0 0
    %960 = vmatprep.mubr.bf16.mxu0 0
    %961 = vmatmul.mubr.bf16.gmra.mxu0 %v628
    %v962 = vpop.f32.mrf.mxu0
    %v963 = vadd.f32 %v878, %v962
    %v964 = vpop.f32.mrf.mxu0
    %v965 = vpop.f32.mrf.mxu0
    %v966 = vadd.f32 %v878, %v965
    %v967 = vpop.f32.mrf.mxu0
    %968 = vdwg.mxu0
    %v969 = vmax.f32 %v963, 0.0
    %v970 = vmax.f32 %v966, 0.0
    %v971 = vpack.c.bf16 %v742, %v741
    %v972 = vpack.c.bf16 %v970, %v969
    %vm973 = vcmask 130048
    %v975 = vsel %vm973, %v191, 0
    %977 = vmatprep.subr.bf16.mxu0 0
    %978 = vmatpush1.bf16.msra.mxu0 0
    %979 = vmatprep.subr.bf16.mxu0 0
    %980 = vmatpush1.bf16.msra.mxu0 0
    %981 = vmatprep.subr.bf16.mxu0 0
    %982 = vmatpush1.bf16.msra.mxu0 0
    %983 = vmatprep.subr.bf16.mxu0 0
    %984 = vmatpush1.bf16.msra.mxu0 0
    %985 = vmatprep.subr.bf16.mxu0 0
    %986 = vmatpush1.bf16.msra.mxu0 0
    %987 = vmatprep.subr.bf16.mxu0 0
    %988 = vmatpush1.bf16.msra.mxu0 0
    %989 = vmatprep.subr.bf16.mxu0 0
    %990 = vmatpush1.bf16.msra.mxu0 0
    %991 = vmatprep.subr.bf16.mxu0 0
    %992 = vmatpush1.bf16.msra.mxu0 %v972
    %993 = vmatprep.subr.bf16.mxu0 0
    %994 = vmatpush2.bf16.msra.mxu0 0
    %995 = vmatprep.subr.bf16.mxu0 0
    %996 = vmatpush2.bf16.msra.mxu0 0
    %997 = vmatprep.subr.bf16.mxu0 0
    %998 = vmatpush2.bf16.msra.mxu0 0
    %999 = vmatprep.subr.bf16.mxu0 0
    %1000 = vmatpush2.bf16.msra.mxu0 0
    %1001 = vmatprep.subr.bf16.mxu0 0
    %1002 = vmatpush2.bf16.msra.mxu0 0
    %1003 = vmatprep.subr.bf16.mxu0 0
    %1004 = vmatpush2.bf16.msra.mxu0 0
    %1005 = vmatprep.subr.bf16.mxu0 0
    %1006 = vmatpush2.bf16.msra.mxu0 0
    %1007 = vmatprep.subr.bf16.mxu0 0
    %1008 = vmatpush2.bf16.msra.mxu0 0
    %1009 = vmatprep.mubr.bf16.mxu0 0
    %1010 = vmatmul.mubr.bf16.gmra.mxu0 %v975
    %v1011 = vpop.f32.mrf.mxu0
    %v1012 = vadd.f32 0.0, %v1011
    %v1013 = vpop.f32.mrf.mxu0
    %v1014 = vpop.f32.mrf.mxu0
    %v1015 = vpop.f32.mrf.mxu0
    %1016 = vdwg.mxu0
    %v1018 = vsel %vm973, %v190, 0
    %1020 = vmatprep.subr.bf16.mxu0 0
    %1021 = vmatpush1.bf16.msra.mxu0 0
    %1022 = vmatprep.subr.bf16.mxu0 0
    %1023 = vmatpush1.bf16.msra.mxu0 0
    %1024 = vmatprep.subr.bf16.mxu0 0
    %1025 = vmatpush1.bf16.msra.mxu0 0
    %1026 = vmatprep.subr.bf16.mxu0 0
    %1027 = vmatpush1.bf16.msra.mxu0 0
    %1028 = vmatprep.subr.bf16.mxu0 0
    %1029 = vmatpush1.bf16.msra.mxu0 0
    %1030 = vmatprep.subr.bf16.mxu0 0
    %1031 = vmatpush1.bf16.msra.mxu0 0
    %1032 = vmatprep.subr.bf16.mxu0 0
    %1033 = vmatpush1.bf16.msra.mxu0 0
    %1034 = vmatprep.subr.bf16.mxu0 0
    %1035 = vmatpush1.bf16.msra.mxu0 %v971
    %1036 = vmatprep.subr.bf16.mxu0 0
    %1037 = vmatpush2.bf16.msra.mxu0 0
    %1038 = vmatprep.subr.bf16.mxu0 0
    %1039 = vmatpush2.bf16.msra.mxu0 0
    %1040 = vmatprep.subr.bf16.mxu0 0
    %1041 = vmatpush2.bf16.msra.mxu0 0
    %1042 = vmatprep.subr.bf16.mxu0 0
    %1043 = vmatpush2.bf16.msra.mxu0 0
    %1044 = vmatprep.subr.bf16.mxu0 0
    %1045 = vmatpush2.bf16.msra.mxu0 0
    %1046 = vmatprep.subr.bf16.mxu0 0
    %1047 = vmatpush2.bf16.msra.mxu0 0
    %1048 = vmatprep.subr.bf16.mxu0 0
    %1049 = vmatpush2.bf16.msra.mxu0 0
    %1050 = vmatprep.subr.bf16.mxu0 0
    %1051 = vmatpush2.bf16.msra.mxu0 0
    %1052 = vmatprep.mubr.bf16.mxu0 0
    %1053 = vmatmul.mubr.bf16.gmra.mxu0 %v1018
    %v1054 = vpop.f32.mrf.mxu0
    %v1055 = vadd.f32 %v1012, %v1054
    %v1056 = vpop.f32.mrf.mxu0
    %v1057 = vpop.f32.mrf.mxu0
    %v1058 = vpop.f32.mrf.mxu0
    %1059 = vdwg.mxu0
    %1061 = vset.pattern.permute.xlu0 0
    %1062 = vperm.xlu0 %1061, %v192
    %v1063 = vpop.permute.xlu0 %1062
    %v1065 = vmul.f32 %v1055, %v1063
    %v1066 = vpack.c.bf16 %v1065, %v1065
    %v1067 = vld [vmem:[#allocation13] sm:$0xf]
    %v1068 = vld [vmem:[#allocation13 + $0x4] sm:$0xf]
    %v1069 = vld [vmem:[#allocation13 + $0x8] sm:$0xf]
    %v1070 = vld [vmem:[#allocation13 + $0xc] sm:$0xf]
    %v1071 = vld [vmem:[#allocation13 + $0x10] sm:$0xf]
    %v1072 = vld [vmem:[#allocation13 + $0x14] sm:$0xf]
    %v1073 = vld [vmem:[#allocation13 + $0x18] sm:$0xf]
    %v1074 = vld [vmem:[#allocation13 + $0x1c] sm:$0xf]
    %v1075 = vld [vmem:[#allocation13 + $0x20] sm:$0xf]
    %v1076 = vld [vmem:[#allocation13 + $0x24] sm:$0xf]
    %v1077 = vld [vmem:[#allocation13 + $0x28] sm:$0xf]
    %v1078 = vld [vmem:[#allocation13 + $0x2c] sm:$0xf]
    %v1079 = vld [vmem:[#allocation13 + $0x30] sm:$0xf]
    %v1080 = vld [vmem:[#allocation13 + $0x34] sm:$0xf]
    %v1081 = vld [vmem:[#allocation13 + $0x38] sm:$0xf]
    %v1082 = vld [vmem:[#allocation13 + $0x3c] sm:$0xf]
    %v1083 = vld [vmem:[%s18] sm:$0x1]
    %v1085 = vlaneseq
    %v1086 = vshrl.u32 %v1085, 7
    %v1087 = vsub.s32 0, %v1086
    %v1088 = vrot.slane %v1083, %v1087
    %v1106 = vunpack.c.l.b16 %v1067
    %v1107 = vunpack.c.l.b16 %v1068
    %v1108 = vunpack.c.l.b16 %v1069
    %v1109 = vunpack.c.l.b16 %v1070
    %v1110 = vunpack.c.l.b16 %v1071
    %v1111 = vunpack.c.l.b16 %v1072
    %v1112 = vunpack.c.l.b16 %v1073
    %v1113 = vunpack.c.l.b16 %v1074
    %v1114 = vunpack.c.l.b16 %v1075
    %v1115 = vunpack.c.l.b16 %v1076
    %v1116 = vunpack.c.l.b16 %v1077
    %v1117 = vunpack.c.l.b16 %v1078
    %v1118 = vunpack.c.l.b16 %v1079
    %v1119 = vunpack.c.l.b16 %v1080
    %v1120 = vunpack.c.l.b16 %v1081
    %v1121 = vunpack.c.l.b16 %v1082
    %v1122 = vpack.c.b16 %v1107, %v1106
    %v1123 = vpack.c.b16 %v1109, %v1108
    %v1124 = vpack.c.b16 %v1111, %v1110
    %v1125 = vpack.c.b16 %v1113, %v1112
    %v1126 = vpack.c.b16 %v1115, %v1114
    %v1127 = vpack.c.b16 %v1117, %v1116
    %v1128 = vpack.c.b16 %v1119, %v1118
    %v1129 = vpack.c.b16 %v1121, %v1120
    %1138 = vmatprep.subr.bf16.mxu0 0
    %1139 = vmatpush1.bf16.msra.mxu0 %v1129
    %1140 = vmatprep.subr.bf16.mxu0 0
    %1141 = vmatpush1.bf16.msra.mxu0 %v1128
    %1142 = vmatprep.subr.bf16.mxu0 0
    %1143 = vmatpush1.bf16.msra.mxu0 %v1127
    %1144 = vmatprep.subr.bf16.mxu0 0
    %1145 = vmatpush1.bf16.msra.mxu0 %v1126
    %1146 = vmatprep.subr.bf16.mxu0 0
    %1147 = vmatpush1.bf16.msra.mxu0 %v1125
    %1148 = vmatprep.subr.bf16.mxu0 0
    %1149 = vmatpush1.bf16.msra.mxu0 %v1124
    %1150 = vmatprep.subr.bf16.mxu0 0
    %1151 = vmatpush1.bf16.msra.mxu0 %v1123
    %1152 = vmatprep.subr.bf16.mxu0 0
    %1153 = vmatpush1.bf16.msra.mxu0 %v1122
    %1154 = vmatprep.subr.bf16.mxu0 0
    %1155 = vmatpush2.bf16.msra.mxu0 0
    %1156 = vmatprep.subr.bf16.mxu0 0
    %1157 = vmatpush2.bf16.msra.mxu0 0
    %1158 = vmatprep.subr.bf16.mxu0 0
    %1159 = vmatpush2.bf16.msra.mxu0 0
    %1160 = vmatprep.subr.bf16.mxu0 0
    %1161 = vmatpush2.bf16.msra.mxu0 0
    %1162 = vmatprep.subr.bf16.mxu0 0
    %1163 = vmatpush2.bf16.msra.mxu0 0
    %1164 = vmatprep.subr.bf16.mxu0 0
    %1165 = vmatpush2.bf16.msra.mxu0 0
    %1166 = vmatprep.subr.bf16.mxu0 0
    %1167 = vmatpush2.bf16.msra.mxu0 0
    %1168 = vmatprep.subr.bf16.mxu0 0
    %1169 = vmatpush2.bf16.msra.mxu0 0
    %1170 = vmatprep.mubr.bf16.mxu0 0
    %1171 = vmatmul.mubr.bf16.gmra.mxu0 %v1066
    %v1172 = vpop.f32.mrf.mxu0
    %v1173 = vadd.f32 %v1088, %v1172
    %v1174 = vpop.f32.mrf.mxu0
    %v1175 = vpop.f32.mrf.mxu0
    %v1176 = vpop.f32.mrf.mxu0
    %1177 = vdwg.mxu0
    %v1178 = vmax.f32 %v1173, 0.0
    %v1179 = vpack.c.bf16 %v1178, %v1178
    %v1180 = vld [vmem:[#allocation14] sm:$0xf]
    %v1181 = vld [vmem:[#allocation14 + $0x4] sm:$0xf]
    %v1182 = vld [vmem:[#allocation14 + $0x8] sm:$0xf]
    %v1183 = vld [vmem:[#allocation14 + $0xc] sm:$0xf]
    %v1184 = vld [vmem:[#allocation14 + $0x10] sm:$0xf]
    %v1185 = vld [vmem:[#allocation14 + $0x14] sm:$0xf]
    %v1186 = vld [vmem:[#allocation14 + $0x18] sm:$0xf]
    %v1187 = vld [vmem:[#allocation14 + $0x1c] sm:$0xf]
    %v1188 = vld [vmem:[#allocation14 + $0x20] sm:$0xf]
    %v1189 = vld [vmem:[#allocation14 + $0x24] sm:$0xf]
    %v1190 = vld [vmem:[#allocation14 + $0x28] sm:$0xf]
    %v1191 = vld [vmem:[#allocation14 + $0x2c] sm:$0xf]
    %v1192 = vld [vmem:[#allocation14 + $0x30] sm:$0xf]
    %v1193 = vld [vmem:[#allocation14 + $0x34] sm:$0xf]
    %v1194 = vld [vmem:[#allocation14 + $0x38] sm:$0xf]
    %v1195 = vld [vmem:[#allocation14 + $0x3c] sm:$0xf]
    %v1196 = vld [vmem:[%s20] sm:$0x1]
    %v1198 = vlaneseq
    %v1199 = vshrl.u32 %v1198, 7
    %v1200 = vsub.s32 0, %v1199
    %v1201 = vrot.slane %v1196, %v1200
    %v1219 = vunpack.c.l.b16 %v1180
    %v1220 = vunpack.c.l.b16 %v1181
    %v1221 = vunpack.c.l.b16 %v1182
    %v1222 = vunpack.c.l.b16 %v1183
    %v1223 = vunpack.c.l.b16 %v1184
    %v1224 = vunpack.c.l.b16 %v1185
    %v1225 = vunpack.c.l.b16 %v1186
    %v1226 = vunpack.c.l.b16 %v1187
    %v1227 = vunpack.c.l.b16 %v1188
    %v1228 = vunpack.c.l.b16 %v1189
    %v1229 = vunpack.c.l.b16 %v1190
    %v1230 = vunpack.c.l.b16 %v1191
    %v1231 = vunpack.c.l.b16 %v1192
    %v1232 = vunpack.c.l.b16 %v1193
    %v1233 = vunpack.c.l.b16 %v1194
    %v1234 = vunpack.c.l.b16 %v1195
    %v1235 = vpack.c.b16 %v1220, %v1219
    %v1236 = vpack.c.b16 %v1222, %v1221
    %v1237 = vpack.c.b16 %v1224, %v1223
    %v1238 = vpack.c.b16 %v1226, %v1225
    %v1239 = vpack.c.b16 %v1228, %v1227
    %v1240 = vpack.c.b16 %v1230, %v1229
    %v1241 = vpack.c.b16 %v1232, %v1231
    %v1242 = vpack.c.b16 %v1234, %v1233
    %1251 = vmatprep.subr.bf16.mxu0 0
    %1252 = vmatpush1.bf16.msra.mxu0 %v1242
    %1253 = vmatprep.subr.bf16.mxu0 0
    %1254 = vmatpush1.bf16.msra.mxu0 %v1241
    %1255 = vmatprep.subr.bf16.mxu0 0
    %1256 = vmatpush1.bf16.msra.mxu0 %v1240
    %1257 = vmatprep.subr.bf16.mxu0 0
    %1258 = vmatpush1.bf16.msra.mxu0 %v1239
    %1259 = vmatprep.subr.bf16.mxu0 0
    %1260 = vmatpush1.bf16.msra.mxu0 %v1238
    %1261 = vmatprep.subr.bf16.mxu0 0
    %1262 = vmatpush1.bf16.msra.mxu0 %v1237
    %1263 = vmatprep.subr.bf16.mxu0 0
    %1264 = vmatpush1.bf16.msra.mxu0 %v1236
    %1265 = vmatprep.subr.bf16.mxu0 0
    %1266 = vmatpush1.bf16.msra.mxu0 %v1235
    %1267 = vmatprep.subr.bf16.mxu0 0
    %1268 = vmatpush2.bf16.msra.mxu0 0
    %1269 = vmatprep.subr.bf16.mxu0 0
    %1270 = vmatpush2.bf16.msra.mxu0 0
    %1271 = vmatprep.subr.bf16.mxu0 0
    %1272 = vmatpush2.bf16.msra.mxu0 0
    %1273 = vmatprep.subr.bf16.mxu0 0
    %1274 = vmatpush2.bf16.msra.mxu0 0
    %1275 = vmatprep.subr.bf16.mxu0 0
    %1276 = vmatpush2.bf16.msra.mxu0 0
    %1277 = vmatprep.subr.bf16.mxu0 0
    %1278 = vmatpush2.bf16.msra.mxu0 0
    %1279 = vmatprep.subr.bf16.mxu0 0
    %1280 = vmatpush2.bf16.msra.mxu0 0
    %1281 = vmatprep.subr.bf16.mxu0 0
    %1282 = vmatpush2.bf16.msra.mxu0 0
    %1283 = vmatprep.mubr.bf16.mxu0 0
    %1284 = vmatmul.mubr.bf16.gmra.mxu0 %v1179
    %v1285 = vpop.f32.mrf.mxu0
    %v1286 = vadd.f32 %v1201, %v1285
    %v1287 = vpop.f32.mrf.mxu0
    %v1288 = vpop.f32.mrf.mxu0
    %v1289 = vpop.f32.mrf.mxu0
    %1290 = vdwg.mxu0
    %v1291 = vmax.f32 %v1286, 0.0
    %v1292 = vpack.c.bf16 %v1291, %v1291
    %s1293 = scalar_lea.vmem [#allocation2], 64
    %v1294 = vld [vmem:[%s1293] sm:$0xf]
    %v1295 = vld [vmem:[%s1293 + $0x4] sm:$0xf]
    %v1296 = vld [vmem:[%s1293 + $0x8] sm:$0xf]
    %v1297 = vld [vmem:[%s1293 + $0xc] sm:$0xf]
    %v1298 = vld [vmem:[%s1293 + $0x10] sm:$0xf]
    %v1299 = vld [vmem:[%s1293 + $0x14] sm:$0xf]
    %v1300 = vld [vmem:[%s1293 + $0x18] sm:$0xf]
    %v1301 = vld [vmem:[%s1293 + $0x1c] sm:$0xf]
    %v1302 = vld [vmem:[%s1293 + $0x20] sm:$0xf]
    %v1303 = vld [vmem:[%s1293 + $0x24] sm:$0xf]
    %v1304 = vld [vmem:[%s1293 + $0x28] sm:$0xf]
    %v1305 = vld [vmem:[%s1293 + $0x2c] sm:$0xf]
    %v1306 = vld [vmem:[%s1293 + $0x30] sm:$0xf]
    %v1307 = vld [vmem:[%s1293 + $0x34] sm:$0xf]
    %v1308 = vld [vmem:[%s1293 + $0x38] sm:$0xf]
    %v1309 = vld [vmem:[%s1293 + $0x3c] sm:$0xf]
    %v1326 = vunpack.c.l.b16 %v1294
    %v1327 = vunpack.c.l.b16 %v1295
    %v1328 = vunpack.c.l.b16 %v1296
    %v1329 = vunpack.c.l.b16 %v1297
    %v1330 = vunpack.c.l.b16 %v1298
    %v1331 = vunpack.c.l.b16 %v1299
    %v1332 = vunpack.c.l.b16 %v1300
    %v1333 = vunpack.c.l.b16 %v1301
    %v1334 = vunpack.c.l.b16 %v1302
    %v1335 = vunpack.c.l.b16 %v1303
    %v1336 = vunpack.c.l.b16 %v1304
    %v1337 = vunpack.c.l.b16 %v1305
    %v1338 = vunpack.c.l.b16 %v1306
    %v1339 = vunpack.c.l.b16 %v1307
    %v1340 = vunpack.c.l.b16 %v1308
    %v1341 = vunpack.c.l.b16 %v1309
    %v1342 = vpack.c.b16 %v1327, %v1326
    %v1343 = vpack.c.b16 %v1329, %v1328
    %v1344 = vpack.c.b16 %v1331, %v1330
    %v1345 = vpack.c.b16 %v1333, %v1332
    %v1346 = vpack.c.b16 %v1335, %v1334
    %v1347 = vpack.c.b16 %v1337, %v1336
    %v1348 = vpack.c.b16 %v1339, %v1338
    %v1349 = vpack.c.b16 %v1341, %v1340
    %1358 = vmatprep.subr.bf16.mxu0 0
    %1359 = vmatpush1.bf16.msra.mxu0 %v1349
    %1360 = vmatprep.subr.bf16.mxu0 0
    %1361 = vmatpush1.bf16.msra.mxu0 %v1348
    %1362 = vmatprep.subr.bf16.mxu0 0
    %1363 = vmatpush1.bf16.msra.mxu0 %v1347
    %1364 = vmatprep.subr.bf16.mxu0 0
    %1365 = vmatpush1.bf16.msra.mxu0 %v1346
    %1366 = vmatprep.subr.bf16.mxu0 0
    %1367 = vmatpush1.bf16.msra.mxu0 %v1345
    %1368 = vmatprep.subr.bf16.mxu0 0
    %1369 = vmatpush1.bf16.msra.mxu0 %v1344
    %1370 = vmatprep.subr.bf16.mxu0 0
    %1371 = vmatpush1.bf16.msra.mxu0 %v1343
    %1372 = vmatprep.subr.bf16.mxu0 0
    %1373 = vmatpush1.bf16.msra.mxu0 %v1342
    %1374 = vmatprep.subr.bf16.mxu0 0
    %1375 = vmatpush2.bf16.msra.mxu0 0
    %1376 = vmatprep.subr.bf16.mxu0 0
    %1377 = vmatpush2.bf16.msra.mxu0 0
    %1378 = vmatprep.subr.bf16.mxu0 0
    %1379 = vmatpush2.bf16.msra.mxu0 0
    %1380 = vmatprep.subr.bf16.mxu0 0
    %1381 = vmatpush2.bf16.msra.mxu0 0
    %1382 = vmatprep.subr.bf16.mxu0 0
    %1383 = vmatpush2.bf16.msra.mxu0 0
    %1384 = vmatprep.subr.bf16.mxu0 0
    %1385 = vmatpush2.bf16.msra.mxu0 0
    %1386 = vmatprep.subr.bf16.mxu0 0
    %1387 = vmatpush2.bf16.msra.mxu0 0
    %1388 = vmatprep.subr.bf16.mxu0 0
    %1389 = vmatpush2.bf16.msra.mxu0 0
    %1390 = vmatprep.mubr.bf16.mxu0 0
    %1391 = vmatmul.mubr.bf16.gmra.mxu0 %v1292
    %v1392 = vpop.f32.mrf.mxu0
    %v1393 = vadd.f32 0.0, %v1392
    %v1394 = vpop.f32.mrf.mxu0
    %v1395 = vpop.f32.mrf.mxu0
    %v1396 = vpop.f32.mrf.mxu0
    %1397 = vdwg.mxu0
    %s1398 = scalar_lea.vmem [#allocation7], 64
    %v1399 = vld [vmem:[%s1398] sm:$0xf]
    %v1400 = vld [vmem:[%s1398 + $0x4] sm:$0xf]
    %v1401 = vld [vmem:[%s1398 + $0x8] sm:$0xf]
    %v1402 = vld [vmem:[%s1398 + $0xc] sm:$0xf]
    %v1403 = vld [vmem:[%s1398 + $0x10] sm:$0xf]
    %v1404 = vld [vmem:[%s1398 + $0x14] sm:$0xf]
    %v1405 = vld [vmem:[%s1398 + $0x18] sm:$0xf]
    %v1406 = vld [vmem:[%s1398 + $0x1c] sm:$0xf]
    %v1407 = vld [vmem:[%s1398 + $0x20] sm:$0xf]
    %v1408 = vld [vmem:[%s1398 + $0x24] sm:$0xf]
    %v1409 = vld [vmem:[%s1398 + $0x28] sm:$0xf]
    %v1410 = vld [vmem:[%s1398 + $0x2c] sm:$0xf]
    %v1411 = vld [vmem:[%s1398 + $0x30] sm:$0xf]
    %v1412 = vld [vmem:[%s1398 + $0x34] sm:$0xf]
    %v1413 = vld [vmem:[%s1398 + $0x38] sm:$0xf]
    %v1414 = vld [vmem:[%s1398 + $0x3c] sm:$0xf]
    %v1431 = vunpack.c.l.b16 %v1399
    %v1432 = vunpack.c.l.b16 %v1400
    %v1433 = vunpack.c.l.b16 %v1401
    %v1434 = vunpack.c.l.b16 %v1402
    %v1435 = vunpack.c.l.b16 %v1403
    %v1436 = vunpack.c.l.b16 %v1404
    %v1437 = vunpack.c.l.b16 %v1405
    %v1438 = vunpack.c.l.b16 %v1406
    %v1439 = vunpack.c.l.b16 %v1407
    %v1440 = vunpack.c.l.b16 %v1408
    %v1441 = vunpack.c.l.b16 %v1409
    %v1442 = vunpack.c.l.b16 %v1410
    %v1443 = vunpack.c.l.b16 %v1411
    %v1444 = vunpack.c.l.b16 %v1412
    %v1445 = vunpack.c.l.b16 %v1413
    %v1446 = vunpack.c.l.b16 %v1414
    %v1447 = vpack.c.b16 %v1432, %v1431
    %v1448 = vpack.c.b16 %v1434, %v1433
    %v1449 = vpack.c.b16 %v1436, %v1435
    %v1450 = vpack.c.b16 %v1438, %v1437
    %v1451 = vpack.c.b16 %v1440, %v1439
    %v1452 = vpack.c.b16 %v1442, %v1441
    %v1453 = vpack.c.b16 %v1444, %v1443
    %v1454 = vpack.c.b16 %v1446, %v1445
    %1463 = vmatprep.subr.bf16.mxu0 0
    %1464 = vmatpush1.bf16.msra.mxu0 %v1454
    %1465 = vmatprep.subr.bf16.mxu0 0
    %1466 = vmatpush1.bf16.msra.mxu0 %v1453
    %1467 = vmatprep.subr.bf16.mxu0 0
    %1468 = vmatpush1.bf16.msra.mxu0 %v1452
    %1469 = vmatprep.subr.bf16.mxu0 0
    %1470 = vmatpush1.bf16.msra.mxu0 %v1451
    %1471 = vmatprep.subr.bf16.mxu0 0
    %1472 = vmatpush1.bf16.msra.mxu0 %v1450
    %1473 = vmatprep.subr.bf16.mxu0 0
    %1474 = vmatpush1.bf16.msra.mxu0 %v1449
    %1475 = vmatprep.subr.bf16.mxu0 0
    %1476 = vmatpush1.bf16.msra.mxu0 %v1448
    %1477 = vmatprep.subr.bf16.mxu0 0
    %1478 = vmatpush1.bf16.msra.mxu0 %v1447
    %1479 = vmatprep.subr.bf16.mxu0 0
    %1480 = vmatpush2.bf16.msra.mxu0 0
    %1481 = vmatprep.subr.bf16.mxu0 0
    %1482 = vmatpush2.bf16.msra.mxu0 0
    %1483 = vmatprep.subr.bf16.mxu0 0
    %1484 = vmatpush2.bf16.msra.mxu0 0
    %1485 = vmatprep.subr.bf16.mxu0 0
    %1486 = vmatpush2.bf16.msra.mxu0 0
    %1487 = vmatprep.subr.bf16.mxu0 0
    %1488 = vmatpush2.bf16.msra.mxu0 0
    %1489 = vmatprep.subr.bf16.mxu0 0
    %1490 = vmatpush2.bf16.msra.mxu0 0
    %1491 = vmatprep.subr.bf16.mxu0 0
    %1492 = vmatpush2.bf16.msra.mxu0 0
    %1493 = vmatprep.subr.bf16.mxu0 0
    %1494 = vmatpush2.bf16.msra.mxu0 0
    %1495 = vmatprep.mubr.bf16.mxu0 0
    %1496 = vmatmul.mubr.bf16.gmra.mxu0 %v1292
    %v1497 = vpop.f32.mrf.mxu0
    %v1498 = vadd.f32 0.0, %v1497
    %v1499 = vpop.f32.mrf.mxu0
    %v1500 = vpop.f32.mrf.mxu0
    %v1501 = vpop.f32.mrf.mxu0
    %1502 = vdwg.mxu0
    %v1503 = vpack.c.bf16 %v1393, %v1393
    %v1504 = vpack.c.bf16 %v856, %v855
    %s1505 = scalar_lea.vmem [#allocation5], 64
    %v1506 = vld [vmem:[%s1505] sm:$0xf]
    %v1507 = vld [vmem:[%s1505 + $0x4] sm:$0xf]
    %v1508 = vld [vmem:[%s1505 + $0x8] sm:$0xf]
    %v1509 = vld [vmem:[%s1505 + $0xc] sm:$0xf]
    %v1510 = vld [vmem:[%s1505 + $0x10] sm:$0xf]
    %v1511 = vld [vmem:[%s1505 + $0x14] sm:$0xf]
    %v1512 = vld [vmem:[%s1505 + $0x18] sm:$0xf]
    %v1513 = vld [vmem:[%s1505 + $0x1c] sm:$0xf]
    %v1514 = vld [vmem:[%s1505 + $0x20] sm:$0xf]
    %v1515 = vld [vmem:[%s1505 + $0x24] sm:$0xf]
    %v1516 = vld [vmem:[%s1505 + $0x28] sm:$0xf]
    %v1517 = vld [vmem:[%s1505 + $0x2c] sm:$0xf]
    %v1518 = vld [vmem:[%s1505 + $0x30] sm:$0xf]
    %v1519 = vld [vmem:[%s1505 + $0x34] sm:$0xf]
    %v1520 = vld [vmem:[%s1505 + $0x38] sm:$0xf]
    %v1521 = vld [vmem:[%s1505 + $0x3c] sm:$0xf]
    %v1538 = vunpack.c.l.b16 %v1506
    %v1539 = vunpack.c.l.b16 %v1507
    %v1540 = vunpack.c.l.b16 %v1508
    %v1541 = vunpack.c.l.b16 %v1509
    %v1542 = vunpack.c.l.b16 %v1510
    %v1543 = vunpack.c.l.b16 %v1511
    %v1544 = vunpack.c.l.b16 %v1512
    %v1545 = vunpack.c.l.b16 %v1513
    %v1546 = vunpack.c.l.b16 %v1514
    %v1547 = vunpack.c.l.b16 %v1515
    %v1548 = vunpack.c.l.b16 %v1516
    %v1549 = vunpack.c.l.b16 %v1517
    %v1550 = vunpack.c.l.b16 %v1518
    %v1551 = vunpack.c.l.b16 %v1519
    %v1552 = vunpack.c.l.b16 %v1520
    %v1553 = vunpack.c.l.b16 %v1521
    %v1554 = vpack.c.b16 %v1539, %v1538
    %v1555 = vpack.c.b16 %v1541, %v1540
    %v1556 = vpack.c.b16 %v1543, %v1542
    %v1557 = vpack.c.b16 %v1545, %v1544
    %v1558 = vpack.c.b16 %v1547, %v1546
    %v1559 = vpack.c.b16 %v1549, %v1548
    %v1560 = vpack.c.b16 %v1551, %v1550
    %v1561 = vpack.c.b16 %v1553, %v1552
    %1570 = vmatprep.subr.bf16.mxu0 0
    %1571 = vmatpush1.bf16.msra.mxu0 %v1561
    %1572 = vmatprep.subr.bf16.mxu0 0
    %1573 = vmatpush1.bf16.msra.mxu0 %v1560
    %1574 = vmatprep.subr.bf16.mxu0 0
    %1575 = vmatpush1.bf16.msra.mxu0 %v1559
    %1576 = vmatprep.subr.bf16.mxu0 0
    %1577 = vmatpush1.bf16.msra.mxu0 %v1558
    %1578 = vmatprep.subr.bf16.mxu0 0
    %1579 = vmatpush1.bf16.msra.mxu0 %v1557
    %1580 = vmatprep.subr.bf16.mxu0 0
    %1581 = vmatpush1.bf16.msra.mxu0 %v1556
    %1582 = vmatprep.subr.bf16.mxu0 0
    %1583 = vmatpush1.bf16.msra.mxu0 %v1555
    %1584 = vmatprep.subr.bf16.mxu0 0
    %1585 = vmatpush1.bf16.msra.mxu0 %v1554
    %1586 = vmatprep.subr.bf16.mxu0 0
    %1587 = vmatpush2.bf16.msra.mxu0 0
    %1588 = vmatprep.subr.bf16.mxu0 0
    %1589 = vmatpush2.bf16.msra.mxu0 0
    %1590 = vmatprep.subr.bf16.mxu0 0
    %1591 = vmatpush2.bf16.msra.mxu0 0
    %1592 = vmatprep.subr.bf16.mxu0 0
    %1593 = vmatpush2.bf16.msra.mxu0 0
    %1594 = vmatprep.subr.bf16.mxu0 0
    %1595 = vmatpush2.bf16.msra.mxu0 0
    %1596 = vmatprep.subr.bf16.mxu0 0
    %1597 = vmatpush2.bf16.msra.mxu0 0
    %1598 = vmatprep.subr.bf16.mxu0 0
    %1599 = vmatpush2.bf16.msra.mxu0 0
    %1600 = vmatprep.subr.bf16.mxu0 0
    %1601 = vmatpush2.bf16.msra.mxu0 0
    %1602 = vmatprep.mubr.bf16.mxu0 0
    %1603 = vmatmul.mubr.bf16.gmra.mxu0 %v1504
    %v1604 = vpop.f32.mrf.mxu0
    %v1605 = vadd.f32 0.0, %v1604
    %v1606 = vpop.f32.mrf.mxu0
    %v1607 = vpop.f32.mrf.mxu0
    %v1608 = vadd.f32 0.0, %v1607
    %v1609 = vpop.f32.mrf.mxu0
    %1610 = vdwg.mxu0
    %v1612 = vsel %vm517, %v1503, 0
    %1614 = vmatprep.subr.bf16.mxu0 0
    %1615 = vmatpush1.bf16.msra.mxu0 0
    %1616 = vmatprep.subr.bf16.mxu0 0
    %1617 = vmatpush1.bf16.msra.mxu0 0
    %1618 = vmatprep.subr.bf16.mxu0 0
    %1619 = vmatpush1.bf16.msra.mxu0 0
    %1620 = vmatprep.subr.bf16.mxu0 0
    %1621 = vmatpush1.bf16.msra.mxu0 0
    %1622 = vmatprep.subr.bf16.mxu0 0
    %1623 = vmatpush1.bf16.msra.mxu0 0
    %1624 = vmatprep.subr.bf16.mxu0 0
    %1625 = vmatpush1.bf16.msra.mxu0 0
    %1626 = vmatprep.subr.bf16.mxu0 0
    %1627 = vmatpush1.bf16.msra.mxu0 0
    %1628 = vmatprep.subr.bf16.mxu0 0
    %1629 = vmatpush1.bf16.msra.mxu0 %v1612
    %1630 = vmatprep.subr.bf16.mxu0 0
    %1631 = vmatpush2.bf16.msra.mxu0 0
    %1632 = vmatprep.subr.bf16.mxu0 0
    %1633 = vmatpush2.bf16.msra.mxu0 0
    %1634 = vmatprep.subr.bf16.mxu0 0
    %1635 = vmatpush2.bf16.msra.mxu0 0
    %1636 = vmatprep.subr.bf16.mxu0 0
    %1637 = vmatpush2.bf16.msra.mxu0 0
    %1638 = vmatprep.subr.bf16.mxu0 0
    %1639 = vmatpush2.bf16.msra.mxu0 0
    %1640 = vmatprep.subr.bf16.mxu0 0
    %1641 = vmatpush2.bf16.msra.mxu0 0
    %1642 = vmatprep.subr.bf16.mxu0 0
    %1643 = vmatpush2.bf16.msra.mxu0 0
    %1644 = vmatprep.subr.bf16.mxu0 0
    %1645 = vmatpush2.bf16.msra.mxu0 0
    %1646 = vmatprep.mubr.bf16.mxu0 0
    %1647 = vmatmul.mubr.bf16.gmra.mxu0 %v515
    %v1648 = vpop.f32.mrf.mxu0
    %v1649 = vadd.f32 %v1605, %v1648
    %v1650 = vpop.f32.mrf.mxu0
    %v1651 = vpop.f32.mrf.mxu0
    %v1652 = vadd.f32 %v1608, %v1651
    %v1653 = vpop.f32.mrf.mxu0
    %1654 = vdwg.mxu0
    %v1655 = vpack.c.bf16 %v1498, %v1498
    %v1657 = vsel %vm517, %v1655, 0
    %1659 = vmatprep.subr.bf16.mxu0 0
    %1660 = vmatpush1.bf16.msra.mxu0 0
    %1661 = vmatprep.subr.bf16.mxu0 0
    %1662 = vmatpush1.bf16.msra.mxu0 0
    %1663 = vmatprep.subr.bf16.mxu0 0
    %1664 = vmatpush1.bf16.msra.mxu0 0
    %1665 = vmatprep.subr.bf16.mxu0 0
    %1666 = vmatpush1.bf16.msra.mxu0 0
    %1667 = vmatprep.subr.bf16.mxu0 0
    %1668 = vmatpush1.bf16.msra.mxu0 0
    %1669 = vmatprep.subr.bf16.mxu0 0
    %1670 = vmatpush1.bf16.msra.mxu0 0
    %1671 = vmatprep.subr.bf16.mxu0 0
    %1672 = vmatpush1.bf16.msra.mxu0 0
    %1673 = vmatprep.subr.bf16.mxu0 0
    %1674 = vmatpush1.bf16.msra.mxu0 %v1657
    %1675 = vmatprep.subr.bf16.mxu0 0
    %1676 = vmatpush2.bf16.msra.mxu0 0
    %1677 = vmatprep.subr.bf16.mxu0 0
    %1678 = vmatpush2.bf16.msra.mxu0 0
    %1679 = vmatprep.subr.bf16.mxu0 0
    %1680 = vmatpush2.bf16.msra.mxu0 0
    %1681 = vmatprep.subr.bf16.mxu0 0
    %1682 = vmatpush2.bf16.msra.mxu0 0
    %1683 = vmatprep.subr.bf16.mxu0 0
    %1684 = vmatpush2.bf16.msra.mxu0 0
    %1685 = vmatprep.subr.bf16.mxu0 0
    %1686 = vmatpush2.bf16.msra.mxu0 0
    %1687 = vmatprep.subr.bf16.mxu0 0
    %1688 = vmatpush2.bf16.msra.mxu0 0
    %1689 = vmatprep.subr.bf16.mxu0 0
    %1690 = vmatpush2.bf16.msra.mxu0 0
    %1691 = vmatprep.mubr.bf16.mxu0 0
    %1692 = vmatmul.mubr.bf16.gmra.mxu0 %v569
    %v1693 = vpop.f32.mrf.mxu0
    %v1694 = vadd.f32 0.0, %v1693
    %v1695 = vpop.f32.mrf.mxu0
    %v1696 = vpop.f32.mrf.mxu0
    %v1697 = vadd.f32 0.0, %v1696
    %v1698 = vpop.f32.mrf.mxu0
    %1699 = vdwg.mxu0
    %v1700 = vadd.f32 %v1649, %v1694
    %v1701 = vadd.f32 %v1652, %v1697
    %s1702 = scalar_lea.vmem %s10, 1
    %v1703 = vld [vmem:[%s1702] sm:$0x1]
    %v1705 = vlaneseq
    %v1706 = vshrl.u32 %v1705, 7
    %v1707 = vsub.s32 0, %v1706
    %v1708 = vrot.slane %v1703, %v1707
    %v1710 = vadd.f32 %v1700, %v1708
    %v1711 = vadd.f32 %v1701, %v1708
    %v1712 = vmax.f32 %v1710, 0.0
    %v1713 = vmax.f32 %v1711, 0.0
    %v1714 = vpack.c.bf16 %v1713, %v1712
    %s1715 = scalar_lea.vmem [#allocation8], 64
    %v1716 = vld [vmem:[%s1715] sm:$0xf]
    %v1717 = vld [vmem:[%s1715 + $0x4] sm:$0xf]
    %v1718 = vld [vmem:[%s1715 + $0x8] sm:$0xf]
    %v1719 = vld [vmem:[%s1715 + $0xc] sm:$0xf]
    %v1720 = vld [vmem:[%s1715 + $0x10] sm:$0xf]
    %v1721 = vld [vmem:[%s1715 + $0x14] sm:$0xf]
    %v1722 = vld [vmem:[%s1715 + $0x18] sm:$0xf]
    %v1723 = vld [vmem:[%s1715 + $0x1c] sm:$0xf]
    %v1724 = vld [vmem:[%s1715 + $0x20] sm:$0xf]
    %v1725 = vld [vmem:[%s1715 + $0x24] sm:$0xf]
    %v1726 = vld [vmem:[%s1715 + $0x28] sm:$0xf]
    %v1727 = vld [vmem:[%s1715 + $0x2c] sm:$0xf]
    %v1728 = vld [vmem:[%s1715 + $0x30] sm:$0xf]
    %v1729 = vld [vmem:[%s1715 + $0x34] sm:$0xf]
    %v1730 = vld [vmem:[%s1715 + $0x38] sm:$0xf]
    %v1731 = vld [vmem:[%s1715 + $0x3c] sm:$0xf]
    %s1732 = scalar_lea.vmem %s14, 1
    %v1733 = vld [vmem:[%s1732] sm:$0x1]
    %v1735 = vlaneseq
    %v1736 = vshrl.u32 %v1735, 7
    %v1737 = vsub.s32 0, %v1736
    %v1738 = vrot.slane %v1733, %v1737
    %v1756 = vunpack.c.l.b16 %v1716
    %v1757 = vunpack.c.l.b16 %v1717
    %v1758 = vunpack.c.l.b16 %v1718
    %v1759 = vunpack.c.l.b16 %v1719
    %v1760 = vunpack.c.l.b16 %v1720
    %v1761 = vunpack.c.l.b16 %v1721
    %v1762 = vunpack.c.l.b16 %v1722
    %v1763 = vunpack.c.l.b16 %v1723
    %v1764 = vunpack.c.l.b16 %v1724
    %v1765 = vunpack.c.l.b16 %v1725
    %v1766 = vunpack.c.l.b16 %v1726
    %v1767 = vunpack.c.l.b16 %v1727
    %v1768 = vunpack.c.l.b16 %v1728
    %v1769 = vunpack.c.l.b16 %v1729
    %v1770 = vunpack.c.l.b16 %v1730
    %v1771 = vunpack.c.l.b16 %v1731
    %v1772 = vpack.c.b16 %v1757, %v1756
    %v1773 = vpack.c.b16 %v1759, %v1758
    %v1774 = vpack.c.b16 %v1761, %v1760
    %v1775 = vpack.c.b16 %v1763, %v1762
    %v1776 = vpack.c.b16 %v1765, %v1764
    %v1777 = vpack.c.b16 %v1767, %v1766
    %v1778 = vpack.c.b16 %v1769, %v1768
    %v1779 = vpack.c.b16 %v1771, %v1770
    %1788 = vmatprep.subr.bf16.mxu0 0
    %1789 = vmatpush1.bf16.msra.mxu0 %v1779
    %1790 = vmatprep.subr.bf16.mxu0 0
    %1791 = vmatpush1.bf16.msra.mxu0 %v1778
    %1792 = vmatprep.subr.bf16.mxu0 0
    %1793 = vmatpush1.bf16.msra.mxu0 %v1777
    %1794 = vmatprep.subr.bf16.mxu0 0
    %1795 = vmatpush1.bf16.msra.mxu0 %v1776
    %1796 = vmatprep.subr.bf16.mxu0 0
    %1797 = vmatpush1.bf16.msra.mxu0 %v1775
    %1798 = vmatprep.subr.bf16.mxu0 0
    %1799 = vmatpush1.bf16.msra.mxu0 %v1774
    %1800 = vmatprep.subr.bf16.mxu0 0
    %1801 = vmatpush1.bf16.msra.mxu0 %v1773
    %1802 = vmatprep.subr.bf16.mxu0 0
    %1803 = vmatpush1.bf16.msra.mxu0 %v1772
    %1804 = vmatprep.subr.bf16.mxu0 0
    %1805 = vmatpush2.bf16.msra.mxu0 0
    %1806 = vmatprep.subr.bf16.mxu0 0
    %1807 = vmatpush2.bf16.msra.mxu0 0
    %1808 = vmatprep.subr.bf16.mxu0 0
    %1809 = vmatpush2.bf16.msra.mxu0 0
    %1810 = vmatprep.subr.bf16.mxu0 0
    %1811 = vmatpush2.bf16.msra.mxu0 0
    %1812 = vmatprep.subr.bf16.mxu0 0
    %1813 = vmatpush2.bf16.msra.mxu0 0
    %1814 = vmatprep.subr.bf16.mxu0 0
    %1815 = vmatpush2.bf16.msra.mxu0 0
    %1816 = vmatprep.subr.bf16.mxu0 0
    %1817 = vmatpush2.bf16.msra.mxu0 0
    %1818 = vmatprep.subr.bf16.mxu0 0
    %1819 = vmatpush2.bf16.msra.mxu0 0
    %1820 = vmatprep.mubr.bf16.mxu0 0
    %1821 = vmatmul.mubr.bf16.gmra.mxu0 %v1714
    %v1822 = vpop.f32.mrf.mxu0
    %v1823 = vadd.f32 %v1738, %v1822
    %v1824 = vpop.f32.mrf.mxu0
    %v1825 = vpop.f32.mrf.mxu0
    %v1826 = vadd.f32 %v1738, %v1825
    %v1827 = vpop.f32.mrf.mxu0
    %1828 = vdwg.mxu0
    %v1829 = vmax.f32 %v1823, 0.0
    %v1830 = vmax.f32 %v1826, 0.0
    %s1831 = scalar_lea.vmem [#allocation10], 64
    %v1832 = vld [vmem:[%s1831] sm:$0xf]
    %v1833 = vld [vmem:[%s1831 + $0x4] sm:$0xf]
    %v1834 = vld [vmem:[%s1831 + $0x8] sm:$0xf]
    %v1835 = vld [vmem:[%s1831 + $0xc] sm:$0xf]
    %v1836 = vld [vmem:[%s1831 + $0x10] sm:$0xf]
    %v1837 = vld [vmem:[%s1831 + $0x14] sm:$0xf]
    %v1838 = vld [vmem:[%s1831 + $0x18] sm:$0xf]
    %v1839 = vld [vmem:[%s1831 + $0x1c] sm:$0xf]
    %v1840 = vld [vmem:[%s1831 + $0x20] sm:$0xf]
    %v1841 = vld [vmem:[%s1831 + $0x24] sm:$0xf]
    %v1842 = vld [vmem:[%s1831 + $0x28] sm:$0xf]
    %v1843 = vld [vmem:[%s1831 + $0x2c] sm:$0xf]
    %v1844 = vld [vmem:[%s1831 + $0x30] sm:$0xf]
    %v1845 = vld [vmem:[%s1831 + $0x34] sm:$0xf]
    %v1846 = vld [vmem:[%s1831 + $0x38] sm:$0xf]
    %v1847 = vld [vmem:[%s1831 + $0x3c] sm:$0xf]
    %s1848 = scalar_lea.vmem %s15, 1
    %v1849 = vld [vmem:[%s1848] sm:$0x1]
    %v1851 = vlaneseq
    %v1852 = vshrl.u32 %v1851, 7
    %v1853 = vsub.s32 0, %v1852
    %v1854 = vrot.slane %v1849, %v1853
    %v1872 = vunpack.c.l.b16 %v1832
    %v1873 = vunpack.c.l.b16 %v1833
    %v1874 = vunpack.c.l.b16 %v1834
    %v1875 = vunpack.c.l.b16 %v1835
    %v1876 = vunpack.c.l.b16 %v1836
    %v1877 = vunpack.c.l.b16 %v1837
    %v1878 = vunpack.c.l.b16 %v1838
    %v1879 = vunpack.c.l.b16 %v1839
    %v1880 = vunpack.c.l.b16 %v1840
    %v1881 = vunpack.c.l.b16 %v1841
    %v1882 = vunpack.c.l.b16 %v1842
    %v1883 = vunpack.c.l.b16 %v1843
    %v1884 = vunpack.c.l.b16 %v1844
    %v1885 = vunpack.c.l.b16 %v1845
    %v1886 = vunpack.c.l.b16 %v1846
    %v1887 = vunpack.c.l.b16 %v1847
    %v1888 = vpack.c.b16 %v1873, %v1872
    %v1889 = vpack.c.b16 %v1875, %v1874
    %v1890 = vpack.c.b16 %v1877, %v1876
    %v1891 = vpack.c.b16 %v1879, %v1878
    %v1892 = vpack.c.b16 %v1881, %v1880
    %v1893 = vpack.c.b16 %v1883, %v1882
    %v1894 = vpack.c.b16 %v1885, %v1884
    %v1895 = vpack.c.b16 %v1887, %v1886
    %1904 = vmatprep.subr.bf16.mxu0 0
    %1905 = vmatpush1.bf16.msra.mxu0 %v1895
    %1906 = vmatprep.subr.bf16.mxu0 0
    %1907 = vmatpush1.bf16.msra.mxu0 %v1894
    %1908 = vmatprep.subr.bf16.mxu0 0
    %1909 = vmatpush1.bf16.msra.mxu0 %v1893
    %1910 = vmatprep.subr.bf16.mxu0 0
    %1911 = vmatpush1.bf16.msra.mxu0 %v1892
    %1912 = vmatprep.subr.bf16.mxu0 0
    %1913 = vmatpush1.bf16.msra.mxu0 %v1891
    %1914 = vmatprep.subr.bf16.mxu0 0
    %1915 = vmatpush1.bf16.msra.mxu0 %v1890
    %1916 = vmatprep.subr.bf16.mxu0 0
    %1917 = vmatpush1.bf16.msra.mxu0 %v1889
    %1918 = vmatprep.subr.bf16.mxu0 0
    %1919 = vmatpush1.bf16.msra.mxu0 %v1888
    %1920 = vmatprep.subr.bf16.mxu0 0
    %1921 = vmatpush2.bf16.msra.mxu0 0
    %1922 = vmatprep.subr.bf16.mxu0 0
    %1923 = vmatpush2.bf16.msra.mxu0 0
    %1924 = vmatprep.subr.bf16.mxu0 0
    %1925 = vmatpush2.bf16.msra.mxu0 0
    %1926 = vmatprep.subr.bf16.mxu0 0
    %1927 = vmatpush2.bf16.msra.mxu0 0
    %1928 = vmatprep.subr.bf16.mxu0 0
    %1929 = vmatpush2.bf16.msra.mxu0 0
    %1930 = vmatprep.subr.bf16.mxu0 0
    %1931 = vmatpush2.bf16.msra.mxu0 0
    %1932 = vmatprep.subr.bf16.mxu0 0
    %1933 = vmatpush2.bf16.msra.mxu0 0
    %1934 = vmatprep.subr.bf16.mxu0 0
    %1935 = vmatpush2.bf16.msra.mxu0 0
    %1936 = vmatprep.mubr.bf16.mxu0 0
    %1937 = vmatmul.mubr.bf16.gmra.mxu0 %v1714
    %v1938 = vpop.f32.mrf.mxu0
    %v1939 = vadd.f32 %v1854, %v1938
    %v1940 = vpop.f32.mrf.mxu0
    %v1941 = vpop.f32.mrf.mxu0
    %v1942 = vadd.f32 %v1854, %v1941
    %v1943 = vpop.f32.mrf.mxu0
    %1944 = vdwg.mxu0
    %v1945 = vmax.f32 %v1939, 0.0
    %v1946 = vmax.f32 %v1942, 0.0
    %s1947 = scalar_lea.vmem [#allocation11], 64
    %v1948 = vld [vmem:[%s1947] sm:$0xf]
    %v1949 = vld [vmem:[%s1947 + $0x4] sm:$0xf]
    %v1950 = vld [vmem:[%s1947 + $0x8] sm:$0xf]
    %v1951 = vld [vmem:[%s1947 + $0xc] sm:$0xf]
    %v1952 = vld [vmem:[%s1947 + $0x10] sm:$0xf]
    %v1953 = vld [vmem:[%s1947 + $0x14] sm:$0xf]
    %v1954 = vld [vmem:[%s1947 + $0x18] sm:$0xf]
    %v1955 = vld [vmem:[%s1947 + $0x1c] sm:$0xf]
    %v1956 = vld [vmem:[%s1947 + $0x20] sm:$0xf]
    %v1957 = vld [vmem:[%s1947 + $0x24] sm:$0xf]
    %v1958 = vld [vmem:[%s1947 + $0x28] sm:$0xf]
    %v1959 = vld [vmem:[%s1947 + $0x2c] sm:$0xf]
    %v1960 = vld [vmem:[%s1947 + $0x30] sm:$0xf]
    %v1961 = vld [vmem:[%s1947 + $0x34] sm:$0xf]
    %v1962 = vld [vmem:[%s1947 + $0x38] sm:$0xf]
    %v1963 = vld [vmem:[%s1947 + $0x3c] sm:$0xf]
    %s1964 = scalar_lea.vmem %s16, 1
    %v1965 = vld [vmem:[%s1964] sm:$0x1]
    %v1967 = vlaneseq
    %v1968 = vshrl.u32 %v1967, 7
    %v1969 = vsub.s32 0, %v1968
    %v1970 = vrot.slane %v1965, %v1969
    %v1988 = vunpack.c.l.b16 %v1948
    %v1989 = vunpack.c.l.b16 %v1949
    %v1990 = vunpack.c.l.b16 %v1950
    %v1991 = vunpack.c.l.b16 %v1951
    %v1992 = vunpack.c.l.b16 %v1952
    %v1993 = vunpack.c.l.b16 %v1953
    %v1994 = vunpack.c.l.b16 %v1954
    %v1995 = vunpack.c.l.b16 %v1955
    %v1996 = vunpack.c.l.b16 %v1956
    %v1997 = vunpack.c.l.b16 %v1957
    %v1998 = vunpack.c.l.b16 %v1958
    %v1999 = vunpack.c.l.b16 %v1959
    %v2000 = vunpack.c.l.b16 %v1960
    %v2001 = vunpack.c.l.b16 %v1961
    %v2002 = vunpack.c.l.b16 %v1962
    %v2003 = vunpack.c.l.b16 %v1963
    %v2004 = vpack.c.b16 %v1989, %v1988
    %v2005 = vpack.c.b16 %v1991, %v1990
    %v2006 = vpack.c.b16 %v1993, %v1992
    %v2007 = vpack.c.b16 %v1995, %v1994
    %v2008 = vpack.c.b16 %v1997, %v1996
    %v2009 = vpack.c.b16 %v1999, %v1998
    %v2010 = vpack.c.b16 %v2001, %v2000
    %v2011 = vpack.c.b16 %v2003, %v2002
    %2020 = vmatprep.subr.bf16.mxu0 0
    %2021 = vmatpush1.bf16.msra.mxu0 %v2011
    %2022 = vmatprep.subr.bf16.mxu0 0
    %2023 = vmatpush1.bf16.msra.mxu0 %v2010
    %2024 = vmatprep.subr.bf16.mxu0 0
    %2025 = vmatpush1.bf16.msra.mxu0 %v2009
    %2026 = vmatprep.subr.bf16.mxu0 0
    %2027 = vmatpush1.bf16.msra.mxu0 %v2008
    %2028 = vmatprep.subr.bf16.mxu0 0
    %2029 = vmatpush1.bf16.msra.mxu0 %v2007
    %2030 = vmatprep.subr.bf16.mxu0 0
    %2031 = vmatpush1.bf16.msra.mxu0 %v2006
    %2032 = vmatprep.subr.bf16.mxu0 0
    %2033 = vmatpush1.bf16.msra.mxu0 %v2005
    %2034 = vmatprep.subr.bf16.mxu0 0
    %2035 = vmatpush1.bf16.msra.mxu0 %v2004
    %2036 = vmatprep.subr.bf16.mxu0 0
    %2037 = vmatpush2.bf16.msra.mxu0 0
    %2038 = vmatprep.subr.bf16.mxu0 0
    %2039 = vmatpush2.bf16.msra.mxu0 0
    %2040 = vmatprep.subr.bf16.mxu0 0
    %2041 = vmatpush2.bf16.msra.mxu0 0
    %2042 = vmatprep.subr.bf16.mxu0 0
    %2043 = vmatpush2.bf16.msra.mxu0 0
    %2044 = vmatprep.subr.bf16.mxu0 0
    %2045 = vmatpush2.bf16.msra.mxu0 0
    %2046 = vmatprep.subr.bf16.mxu0 0
    %2047 = vmatpush2.bf16.msra.mxu0 0
    %2048 = vmatprep.subr.bf16.mxu0 0
    %2049 = vmatpush2.bf16.msra.mxu0 0
    %2050 = vmatprep.subr.bf16.mxu0 0
    %2051 = vmatpush2.bf16.msra.mxu0 0
    %2052 = vmatprep.mubr.bf16.mxu0 0
    %2053 = vmatmul.mubr.bf16.gmra.mxu0 %v1714
    %v2054 = vpop.f32.mrf.mxu0
    %v2055 = vadd.f32 %v1970, %v2054
    %v2056 = vpop.f32.mrf.mxu0
    %v2057 = vpop.f32.mrf.mxu0
    %v2058 = vadd.f32 %v1970, %v2057
    %v2059 = vpop.f32.mrf.mxu0
    %2060 = vdwg.mxu0
    %v2061 = vmax.f32 %v2055, 0.0
    %v2062 = vmax.f32 %v2058, 0.0
    %v2063 = vpack.c.bf16 %v1830, %v1829
    %v2064 = vpack.c.bf16 %v2062, %v2061
    %2065 = vmatprep.subr.bf16.mxu0 0
    %2066 = vmatpush1.bf16.msra.mxu0 0
    %2067 = vmatprep.subr.bf16.mxu0 0
    %2068 = vmatpush1.bf16.msra.mxu0 0
    %2069 = vmatprep.subr.bf16.mxu0 0
    %2070 = vmatpush1.bf16.msra.mxu0 0
    %2071 = vmatprep.subr.bf16.mxu0 0
    %2072 = vmatpush1.bf16.msra.mxu0 0
    %2073 = vmatprep.subr.bf16.mxu0 0
    %2074 = vmatpush1.bf16.msra.mxu0 0
    %2075 = vmatprep.subr.bf16.mxu0 0
    %2076 = vmatpush1.bf16.msra.mxu0 0
    %2077 = vmatprep.subr.bf16.mxu0 0
    %2078 = vmatpush1.bf16.msra.mxu0 0
    %2079 = vmatprep.subr.bf16.mxu0 0
    %2080 = vmatpush1.bf16.msra.mxu0 %v2064
    %2081 = vmatprep.subr.bf16.mxu0 0
    %2082 = vmatpush2.bf16.msra.mxu0 0
    %2083 = vmatprep.subr.bf16.mxu0 0
    %2084 = vmatpush2.bf16.msra.mxu0 0
    %2085 = vmatprep.subr.bf16.mxu0 0
    %2086 = vmatpush2.bf16.msra.mxu0 0
    %2087 = vmatprep.subr.bf16.mxu0 0
    %2088 = vmatpush2.bf16.msra.mxu0 0
    %2089 = vmatprep.subr.bf16.mxu0 0
    %2090 = vmatpush2.bf16.msra.mxu0 0
    %2091 = vmatprep.subr.bf16.mxu0 0
    %2092 = vmatpush2.bf16.msra.mxu0 0
    %2093 = vmatprep.subr.bf16.mxu0 0
    %2094 = vmatpush2.bf16.msra.mxu0 0
    %2095 = vmatprep.subr.bf16.mxu0 0
    %2096 = vmatpush2.bf16.msra.mxu0 0
    %2097 = vmatprep.mubr.bf16.mxu0 0
    %2098 = vmatmul.mubr.bf16.gmra.mxu0 %v975
    %v2099 = vpop.f32.mrf.mxu0
    %v2100 = vadd.f32 0.0, %v2099
    %v2101 = vpop.f32.mrf.mxu0
    %v2102 = vpop.f32.mrf.mxu0
    %v2103 = vpop.f32.mrf.mxu0
    %2104 = vdwg.mxu0
    %2105 = vmatprep.subr.bf16.mxu0 0
    %2106 = vmatpush1.bf16.msra.mxu0 0
    %2107 = vmatprep.subr.bf16.mxu0 0
    %2108 = vmatpush1.bf16.msra.mxu0 0
    %2109 = vmatprep.subr.bf16.mxu0 0
    %2110 = vmatpush1.bf16.msra.mxu0 0
    %2111 = vmatprep.subr.bf16.mxu0 0
    %2112 = vmatpush1.bf16.msra.mxu0 0
    %2113 = vmatprep.subr.bf16.mxu0 0
    %2114 = vmatpush1.bf16.msra.mxu0 0
    %2115 = vmatprep.subr.bf16.mxu0 0
    %2116 = vmatpush1.bf16.msra.mxu0 0
    %2117 = vmatprep.subr.bf16.mxu0 0
    %2118 = vmatpush1.bf16.msra.mxu0 0
    %2119 = vmatprep.subr.bf16.mxu0 0
    %2120 = vmatpush1.bf16.msra.mxu0 %v2063
    %2121 = vmatprep.subr.bf16.mxu0 0
    %2122 = vmatpush2.bf16.msra.mxu0 0
    %2123 = vmatprep.subr.bf16.mxu0 0
    %2124 = vmatpush2.bf16.msra.mxu0 0
    %2125 = vmatprep.subr.bf16.mxu0 0
    %2126 = vmatpush2.bf16.msra.mxu0 0
    %2127 = vmatprep.subr.bf16.mxu0 0
    %2128 = vmatpush2.bf16.msra.mxu0 0
    %2129 = vmatprep.subr.bf16.mxu0 0
    %2130 = vmatpush2.bf16.msra.mxu0 0
    %2131 = vmatprep.subr.bf16.mxu0 0
    %2132 = vmatpush2.bf16.msra.mxu0 0
    %2133 = vmatprep.subr.bf16.mxu0 0
    %2134 = vmatpush2.bf16.msra.mxu0 0
    %2135 = vmatprep.subr.bf16.mxu0 0
    %2136 = vmatpush2.bf16.msra.mxu0 0
    %2137 = vmatprep.mubr.bf16.mxu0 0
    %2138 = vmatmul.mubr.bf16.gmra.mxu0 %v1018
    %v2139 = vpop.f32.mrf.mxu0
    %v2140 = vadd.f32 %v2100, %v2139
    %v2141 = vpop.f32.mrf.mxu0
    %v2142 = vpop.f32.mrf.mxu0
    %v2143 = vpop.f32.mrf.mxu0
    %2144 = vdwg.mxu0
    %v2145 = vmul.f32 %v2140, %v1063
    %v2146 = vpack.c.bf16 %v2145, %v2145
    %s2147 = scalar_lea.vmem [#allocation13], 64
    %v2148 = vld [vmem:[%s2147] sm:$0xf]
    %v2149 = vld [vmem:[%s2147 + $0x4] sm:$0xf]
    %v2150 = vld [vmem:[%s2147 + $0x8] sm:$0xf]
    %v2151 = vld [vmem:[%s2147 + $0xc] sm:$0xf]
    %v2152 = vld [vmem:[%s2147 + $0x10] sm:$0xf]
    %v2153 = vld [vmem:[%s2147 + $0x14] sm:$0xf]
    %v2154 = vld [vmem:[%s2147 + $0x18] sm:$0xf]
    %v2155 = vld [vmem:[%s2147 + $0x1c] sm:$0xf]
    %v2156 = vld [vmem:[%s2147 + $0x20] sm:$0xf]
    %v2157 = vld [vmem:[%s2147 + $0x24] sm:$0xf]
    %v2158 = vld [vmem:[%s2147 + $0x28] sm:$0xf]
    %v2159 = vld [vmem:[%s2147 + $0x2c] sm:$0xf]
    %v2160 = vld [vmem:[%s2147 + $0x30] sm:$0xf]
    %v2161 = vld [vmem:[%s2147 + $0x34] sm:$0xf]
    %v2162 = vld [vmem:[%s2147 + $0x38] sm:$0xf]
    %v2163 = vld [vmem:[%s2147 + $0x3c] sm:$0xf]
    %s2164 = scalar_lea.vmem %s18, 1
    %v2165 = vld [vmem:[%s2164] sm:$0x1]
    %v2167 = vlaneseq
    %v2168 = vshrl.u32 %v2167, 7
    %v2169 = vsub.s32 0, %v2168
    %v2170 = vrot.slane %v2165, %v2169
    %v2188 = vunpack.c.l.b16 %v2148
    %v2189 = vunpack.c.l.b16 %v2149
    %v2190 = vunpack.c.l.b16 %v2150
    %v2191 = vunpack.c.l.b16 %v2151
    %v2192 = vunpack.c.l.b16 %v2152
    %v2193 = vunpack.c.l.b16 %v2153
    %v2194 = vunpack.c.l.b16 %v2154
    %v2195 = vunpack.c.l.b16 %v2155
    %v2196 = vunpack.c.l.b16 %v2156
    %v2197 = vunpack.c.l.b16 %v2157
    %v2198 = vunpack.c.l.b16 %v2158
    %v2199 = vunpack.c.l.b16 %v2159
    %v2200 = vunpack.c.l.b16 %v2160
    %v2201 = vunpack.c.l.b16 %v2161
    %v2202 = vunpack.c.l.b16 %v2162
    %v2203 = vunpack.c.l.b16 %v2163
    %v2204 = vpack.c.b16 %v2189, %v2188
    %v2205 = vpack.c.b16 %v2191, %v2190
    %v2206 = vpack.c.b16 %v2193, %v2192
    %v2207 = vpack.c.b16 %v2195, %v2194
    %v2208 = vpack.c.b16 %v2197, %v2196
    %v2209 = vpack.c.b16 %v2199, %v2198
    %v2210 = vpack.c.b16 %v2201, %v2200
    %v2211 = vpack.c.b16 %v2203, %v2202
    %2220 = vmatprep.subr.bf16.mxu0 0
    %2221 = vmatpush1.bf16.msra.mxu0 %v2211
    %2222 = vmatprep.subr.bf16.mxu0 0
    %2223 = vmatpush1.bf16.msra.mxu0 %v2210
    %2224 = vmatprep.subr.bf16.mxu0 0
    %2225 = vmatpush1.bf16.msra.mxu0 %v2209
    %2226 = vmatprep.subr.bf16.mxu0 0
    %2227 = vmatpush1.bf16.msra.mxu0 %v2208
    %2228 = vmatprep.subr.bf16.mxu0 0
    %2229 = vmatpush1.bf16.msra.mxu0 %v2207
    %2230 = vmatprep.subr.bf16.mxu0 0
    %2231 = vmatpush1.bf16.msra.mxu0 %v2206
    %2232 = vmatprep.subr.bf16.mxu0 0
    %2233 = vmatpush1.bf16.msra.mxu0 %v2205
    %2234 = vmatprep.subr.bf16.mxu0 0
    %2235 = vmatpush1.bf16.msra.mxu0 %v2204
    %2236 = vmatprep.subr.bf16.mxu0 0
    %2237 = vmatpush2.bf16.msra.mxu0 0
    %2238 = vmatprep.subr.bf16.mxu0 0
    %2239 = vmatpush2.bf16.msra.mxu0 0
    %2240 = vmatprep.subr.bf16.mxu0 0
    %2241 = vmatpush2.bf16.msra.mxu0 0
    %2242 = vmatprep.subr.bf16.mxu0 0
    %2243 = vmatpush2.bf16.msra.mxu0 0
    %2244 = vmatprep.subr.bf16.mxu0 0
    %2245 = vmatpush2.bf16.msra.mxu0 0
    %2246 = vmatprep.subr.bf16.mxu0 0
    %2247 = vmatpush2.bf16.msra.mxu0 0
    %2248 = vmatprep.subr.bf16.mxu0 0
    %2249 = vmatpush2.bf16.msra.mxu0 0
    %2250 = vmatprep.subr.bf16.mxu0 0
    %2251 = vmatpush2.bf16.msra.mxu0 0
    %2252 = vmatprep.mubr.bf16.mxu0 0
    %2253 = vmatmul.mubr.bf16.gmra.mxu0 %v2146
    %v2254 = vpop.f32.mrf.mxu0
    %v2255 = vadd.f32 %v2170, %v2254
    %v2256 = vpop.f32.mrf.mxu0
    %v2257 = vpop.f32.mrf.mxu0
    %v2258 = vpop.f32.mrf.mxu0
    %2259 = vdwg.mxu0
    %v2260 = vmax.f32 %v2255, 0.0
    %v2261 = vpack.c.bf16 %v2260, %v2260
    %s2262 = scalar_lea.vmem [#allocation14], 64
    %v2263 = vld [vmem:[%s2262] sm:$0xf]
    %v2264 = vld [vmem:[%s2262 + $0x4] sm:$0xf]
    %v2265 = vld [vmem:[%s2262 + $0x8] sm:$0xf]
    %v2266 = vld [vmem:[%s2262 + $0xc] sm:$0xf]
    %v2267 = vld [vmem:[%s2262 + $0x10] sm:$0xf]
    %v2268 = vld [vmem:[%s2262 + $0x14] sm:$0xf]
    %v2269 = vld [vmem:[%s2262 + $0x18] sm:$0xf]
    %v2270 = vld [vmem:[%s2262 + $0x1c] sm:$0xf]
    %v2271 = vld [vmem:[%s2262 + $0x20] sm:$0xf]
    %v2272 = vld [vmem:[%s2262 + $0x24] sm:$0xf]
    %v2273 = vld [vmem:[%s2262 + $0x28] sm:$0xf]
    %v2274 = vld [vmem:[%s2262 + $0x2c] sm:$0xf]
    %v2275 = vld [vmem:[%s2262 + $0x30] sm:$0xf]
    %v2276 = vld [vmem:[%s2262 + $0x34] sm:$0xf]
    %v2277 = vld [vmem:[%s2262 + $0x38] sm:$0xf]
    %v2278 = vld [vmem:[%s2262 + $0x3c] sm:$0xf]
    %s2279 = scalar_lea.vmem %s20, 1
    %v2280 = vld [vmem:[%s2279] sm:$0x1]
    %v2282 = vlaneseq
    %v2283 = vshrl.u32 %v2282, 7
    %v2284 = vsub.s32 0, %v2283
    %v2285 = vrot.slane %v2280, %v2284
    %v2303 = vunpack.c.l.b16 %v2263
    %v2304 = vunpack.c.l.b16 %v2264
    %v2305 = vunpack.c.l.b16 %v2265
    %v2306 = vunpack.c.l.b16 %v2266
    %v2307 = vunpack.c.l.b16 %v2267
    %v2308 = vunpack.c.l.b16 %v2268
    %v2309 = vunpack.c.l.b16 %v2269
    %v2310 = vunpack.c.l.b16 %v2270
    %v2311 = vunpack.c.l.b16 %v2271
    %v2312 = vunpack.c.l.b16 %v2272
    %v2313 = vunpack.c.l.b16 %v2273
    %v2314 = vunpack.c.l.b16 %v2274
    %v2315 = vunpack.c.l.b16 %v2275
    %v2316 = vunpack.c.l.b16 %v2276
    %v2317 = vunpack.c.l.b16 %v2277
    %v2318 = vunpack.c.l.b16 %v2278
    %v2319 = vpack.c.b16 %v2304, %v2303
    %v2320 = vpack.c.b16 %v2306, %v2305
    %v2321 = vpack.c.b16 %v2308, %v2307
    %v2322 = vpack.c.b16 %v2310, %v2309
    %v2323 = vpack.c.b16 %v2312, %v2311
    %v2324 = vpack.c.b16 %v2314, %v2313
    %v2325 = vpack.c.b16 %v2316, %v2315
    %v2326 = vpack.c.b16 %v2318, %v2317
    %2335 = vmatprep.subr.bf16.mxu0 0
    %2336 = vmatpush1.bf16.msra.mxu0 %v2326
    %2337 = vmatprep.subr.bf16.mxu0 0
    %2338 = vmatpush1.bf16.msra.mxu0 %v2325
    %2339 = vmatprep.subr.bf16.mxu0 0
    %2340 = vmatpush1.bf16.msra.mxu0 %v2324
    %2341 = vmatprep.subr.bf16.mxu0 0
    %2342 = vmatpush1.bf16.msra.mxu0 %v2323
    %2343 = vmatprep.subr.bf16.mxu0 0
    %2344 = vmatpush1.bf16.msra.mxu0 %v2322
    %2345 = vmatprep.subr.bf16.mxu0 0
    %2346 = vmatpush1.bf16.msra.mxu0 %v2321
    %2347 = vmatprep.subr.bf16.mxu0 0
    %2348 = vmatpush1.bf16.msra.mxu0 %v2320
    %2349 = vmatprep.subr.bf16.mxu0 0
    %2350 = vmatpush1.bf16.msra.mxu0 %v2319
    %2351 = vmatprep.subr.bf16.mxu0 0
    %2352 = vmatpush2.bf16.msra.mxu0 0
    %2353 = vmatprep.subr.bf16.mxu0 0
    %2354 = vmatpush2.bf16.msra.mxu0 0
    %2355 = vmatprep.subr.bf16.mxu0 0
    %2356 = vmatpush2.bf16.msra.mxu0 0
    %2357 = vmatprep.subr.bf16.mxu0 0
    %2358 = vmatpush2.bf16.msra.mxu0 0
    %2359 = vmatprep.subr.bf16.mxu0 0
    %2360 = vmatpush2.bf16.msra.mxu0 0
    %2361 = vmatprep.subr.bf16.mxu0 0
    %2362 = vmatpush2.bf16.msra.mxu0 0
    %2363 = vmatprep.subr.bf16.mxu0 0
    %2364 = vmatpush2.bf16.msra.mxu0 0
    %2365 = vmatprep.subr.bf16.mxu0 0
    %2366 = vmatpush2.bf16.msra.mxu0 0
    %2367 = vmatprep.mubr.bf16.mxu0 0
    %2368 = vmatmul.mubr.bf16.gmra.mxu0 %v2261
    %v2369 = vpop.f32.mrf.mxu0
    %v2370 = vadd.f32 %v2285, %v2369
    %v2371 = vpop.f32.mrf.mxu0
    %v2372 = vpop.f32.mrf.mxu0
    %v2373 = vpop.f32.mrf.mxu0
    %2374 = vdwg.mxu0
    %v2375 = vmax.f32 %v2370, 0.0
    %2376 = vst [vmem:[#allocation16] sm:$0xff] %v2375
    %2377 = vst [vmem:[#allocation17] sm:$0xff] %v1945
    %2378 = vst [vmem:[#allocation17 + $0x8] sm:$0xff] %v1946
    // Predicated region
    $region118: #{tpu_custom_call.1} parent=1 // pred_check
      _
    $region119: #{tpu_custom_call.1} parent=1 // pred_check_branch
      %2380 = sbr.rel (0) target = $region121
    $region120: #{tpu_custom_call.1} parent=1 // pred_region
      %s2382 = ssub.s32 128, 128
      %2383 = vsyncadd [#allocation4], %s2382
      %s2385 = sshll.u32 [#allocation16], 4
      %s2386 = int_to_ptr.vmem [resolvable:$true] %s2385
      %2388 = dma.vmem_to_hbm [thread:$0]  %s2386, 128, %s21, [#allocation4]
    $region121: #{tpu_custom_call.1} parent=1 // pred_fallthru
      _
    // Predicated region
    $region122: #{tpu_custom_call.1} parent=1 // pred_check
      _
    $region123: #{tpu_custom_call.1} parent=1 // pred_check_branch
      %2390 = sbr.rel (0) target = $region125
    $region124: #{tpu_custom_call.1} parent=1 // pred_region
      %s2392 = ssub.s32 256, 256
      %2393 = vsyncadd [#allocation18], %s2392
      %s2394 = sshll.u32 [#allocation17], 4
      %s2395 = int_to_ptr.vmem [resolvable:$true] %s2394
      %2400 = dma.vmem_to_hbm [thread:$0]  %s2395, 256, %s22, [#allocation18], 128, 128, 8
    $region125: #{tpu_custom_call.1} parent=1 // pred_fallthru
      _
    // Predicated region
    $region126: #{tpu_custom_call.1} parent=1 // pred_check
      _
    $region127: #{tpu_custom_call.1} parent=1 // pred_check_branch
      %2402 = sbr.rel (0) target = $region129
    $region128: #{tpu_custom_call.1} parent=1 // pred_region
      %2403 = dma.done [#allocation4], 128
    $region129: #{tpu_custom_call.1} parent=1 // pred_fallthru
      _
    // Predicated region
    $region130: #{tpu_custom_call.1} parent=1 // pred_check
      _
    $region131: #{tpu_custom_call.1} parent=1 // pred_check_branch
      %2405 = sbr.rel (0) target = $region133
    $region132: #{tpu_custom_call.1} parent=1 // pred_region
      %2406 = dma.done [#allocation18], 256
    $region133: #{tpu_custom_call.1} parent=1 // pred_fallthru
      _
    %2407 = vsyncpa [#allocation3], 1
    %2408 = vsyncpa [#allocation6], 1
    %2409 = vsyncpa [#allocation9], 1
    %2410 = vsyncpa [#allocation12], 1
    %2411 = vsyncpa [#allocation15], 1
    %2412 = vsyncpa [#allocation4], 1
    %2413 = vsyncpa [#allocation18], 1

</llo_original>
